<compile_context>
chip_gen: v7x
topology: tpu7x:2x2x1
jax: 0.10.0
libtpu: 0.0.40
codegen_flags: <defaults>
</compile_context>

<pallas_src>
import numpy as np
import jax
import jax.numpy as jnp
from jax.experimental import pallas as pl
from jax.experimental.pallas import tpu as pltpu

# ----------------------------- hyperparameters ------------------------------
crop_size = 16
nc = 3
ndf = 8
num_classes = 4
nz = 10
hack = True
BN_EPS = 1e-5


def _round_up(a, b):
    return (a + b - 1) // b * b


# ------------------- host-side operator construction (once) -----------------
def _conv_toeplitz(w_oihw, H, W, stride, pad):
    """Dense operator T of shape (H*W*Cin, Hout*Wout*Cout) such that, for a
    per-sample NHWC row-major flattening x_flat[(y*W + x)*Cin + ci],
        x_flat @ T == conv2d(x, w, stride, pad)  flattened as
        out_flat[(r*Wout + c)*Cout + co].
    """
    w = np.asarray(w_oihw, np.float32)
    Cout, Cin, kh, kw = w.shape
    Hout = (H + 2 * pad - kh) // stride + 1
    Wout = (W + 2 * pad - kw) // stride + 1
    T = np.zeros((H * W * Cin, Hout * Wout * Cout), np.float32)
    for r in range(Hout):
        for c in range(Wout):
            out_base = (r * Wout + c) * Cout
            for i in range(kh):
                y = r * stride + i - pad
                if not (0 <= y < H):
                    continue
                for j in range(kw):
                    x = c * stride + j - pad
                    if not (0 <= x < W):
                        continue
                    in_base = (y * W + x) * Cin
                    T[in_base:in_base + Cin, out_base:out_base + Cout] = w[:, :, i, j].T
    return T, Hout, Wout


def prepare_operators(params):
    """Fold BatchNorm and build the dense unrolled-conv operators (host, once)."""
    # TODO(synk): BatchNorm2d is folded with running statistics (inference
    # mode); a training-mode forward would use batch statistics instead.
    t1, h1, w1s = _conv_toeplitz(params["w1"], crop_size, crop_size, stride=2, pad=1)

    s2 = np.asarray(params["bn2_gamma"]) / np.sqrt(np.asarray(params["bn2_var"]) + BN_EPS)
    b2 = np.asarray(params["bn2_beta"]) - np.asarray(params["bn2_mean"]) * s2
    w2_folded = np.asarray(params["w2"]) * s2[:, None, None, None]     # fold BN scale
    t2, h2, w2s = _conv_toeplitz(w2_folded, h1, w1s, stride=2, pad=1)
    shift2 = np.tile(b2.astype(np.float32), h2 * w2s)[None, :]          # (1, HW2*Cout2)

    t3, _, _ = _conv_toeplitz(params["w3"], h2, w2s, stride=1, pad=0)

    return {
        "t1": jnp.asarray(t1),          # (1792, 512)
        "t2": jnp.asarray(t2),          # (512, 256)
        "shift2": jnp.asarray(shift2),  # (1, 256)
        "t3": jnp.asarray(t3),          # (256, 1)
    }


# ------------------------------- Pallas kernel ------------------------------
def _disc_fused_kernel(x_ref, t1_ref, t2_ref, shift2_ref, t3_ref, o_ref):
    # stage 1: conv1 (dense unrolled-conv GEMM) + LeakyReLU(0.2)
    h = jnp.dot(x_ref[...], t1_ref[...], preferred_element_type=jnp.float32)
    h = jnp.where(h > 0, h, 0.2 * h)
    # stage 2: conv2 (BN scale already folded into t2) + BN shift + LeakyReLU(0.2)
    h = jnp.dot(h, t2_ref[...], preferred_element_type=jnp.float32) + shift2_ref[...]
    h = jnp.where(h > 0, h, 0.2 * h)
    # stage 3: conv3 (full dense) + numerically stable sigmoid
    y = jnp.dot(h, t3_ref[...], preferred_element_type=jnp.float32)
    z = jnp.exp(-jnp.abs(y))                                   # EUP exp, never overflows
    inv = pl.reciprocal(1.0 + z, approx=True)                  # EUP vrcp (free slot)
    o_ref[...] = jnp.where(y >= 0, inv, z * inv).astype(o_ref.dtype)


# --------------------------------- forward ----------------------------------
@jax.jit
def discriminator_forward_conditional(ops, x, labels):
    """x: (N, nc, crop, crop); labels: (N, num_classes, 1, 1) -> (N,)."""
    N = x.shape[0]
    # labels.repeat(1, 1, crop_size, crop_size) then cat along channels (NCHW)
    labels_rep = jnp.broadcast_to(labels, (N, num_classes, crop_size, crop_size))
    h = jnp.concatenate([x, labels_rep], axis=1)
    # pure layout glue: NCHW -> NHWC -> per-sample flat rows (1x data, no im2col)
    x_flat = h.transpose(0, 2, 3, 1).reshape(N, -1).astype(jnp.float32)

    K1 = ops["t1"].shape[0]
    P = ops["t3"].shape[1]                     # outputs per sample (1 for crop_size=16)

    # batch tiling: "parallel" grid; 256-row cap keeps double-buffered input
    # blocks + resident operators well under v7x's 32 MiB scoped VMEM.
    blk = min(256, _round_up(N, 8))
    n_pad = _round_up(N, blk)
    if n_pad != N:
        x_flat = jnp.pad(x_flat, ((0, n_pad - N), (0, 0)))

    out = pl.pallas_call(
        _disc_fused_kernel,
        out_shape=jax.ShapeDtypeStruct((n_pad, P), jnp.float32),
        grid=(n_pad // blk,),
        in_specs=[
            pl.BlockSpec((blk, K1), lambda i: (i, 0)),          # activations: tiled over batch
            pl.BlockSpec(ops["t1"].shape, lambda i: (0, 0)),    # operators: VMEM-resident
            pl.BlockSpec(ops["t2"].shape, lambda i: (0, 0)),
            pl.BlockSpec(ops["shift2"].shape, lambda i: (0, 0)),
            pl.BlockSpec(ops["t3"].shape, lambda i: (0, 0)),
        ],
        out_specs=pl.BlockSpec((blk, P), lambda i: (i, 0)),
        compiler_params=pltpu.CompilerParams(
            dimension_semantics=("parallel",),
        ),
    )(x_flat, ops["t1"], ops["t2"], ops["shift2"], ops["t3"])

    # output.view(-1, 1).squeeze(1)
    return out[:N].reshape(-1)


# ------------------------------ parameter setup -----------------------------
def init_params(key):
    k1, k2, k3, k4, k5, k6 = jax.random.split(key, 6)
    return {
        # Conv2d(nc + num_classes, ndf, 4, 2, 1, bias=False)
        "w1": 0.02 * jax.random.normal(k1, (ndf, nc + num_classes, 4, 4), jnp.float32),
        # Conv2d(ndf, 2*ndf, 4, 2, 1, bias=False)
        "w2": 0.02 * jax.random.normal(k2, (2 * ndf, ndf, 4, 4), jnp.float32),
        # BatchNorm2d(2*ndf) — non-trivial running stats to exercise the fold
        "bn2_gamma": 1.0 + 0.02 * jax.random.normal(k3, (2 * ndf,), jnp.float32),
        "bn2_beta": 0.01 * jax.random.normal(k5, (2 * ndf,), jnp.float32),
        "bn2_mean": 0.02 * jax.random.normal(k6, (2 * ndf,), jnp.float32),
        "bn2_var": jnp.ones((2 * ndf,), jnp.float32) * 0.9,
        # Conv2d(2*ndf, 1, 4, 1, 0, bias=False)
        "w3": 0.02 * jax.random.normal(k4, (1, 2 * ndf, 4, 4), jnp.float32),
    }


# ------------------------ pure-JAX reference (checking) ----------------------
def _reference_forward(params, x, labels):
    N = x.shape[0]
    labels_rep = jnp.broadcast_to(labels, (N, num_classes, crop_size, crop_size))
    h = jnp.concatenate([x, labels_rep], axis=1)
    dn = ("NCHW", "OIHW", "NCHW")
    h = jax.lax.conv_general_dilated(h, params["w1"], (2, 2), [(1, 1), (1, 1)],
                                     dimension_numbers=dn, precision="highest")
    h = jnp.where(h > 0, h, 0.2 * h)
    h = jax.lax.conv_general_dilated(h, params["w2"], (2, 2), [(1, 1), (1, 1)],
                                     dimension_numbers=dn, precision="highest")
    s = params["bn2_gamma"] / jnp.sqrt(params["bn2_var"] + BN_EPS)
    b = params["bn2_beta"] - params["bn2_mean"] * s
    h = h * s[None, :, None, None] + b[None, :, None, None]
    h = jnp.where(h > 0, h, 0.2 * h)
    h = jax.lax.conv_general_dilated(h, params["w3"], (1, 1), [(0, 0), (0, 0)],
                                     dimension_numbers=dn, precision="highest")
    return jax.nn.sigmoid(h).reshape(-1)


# ----------------------------------- main ------------------------------------
if __name__ == "__main__":
    key = jax.random.PRNGKey(0)
    pkey, xkey, lkey = jax.random.split(key, 3)

    params = init_params(pkey)
    ops = prepare_operators(params)

    N = 2
    x = jax.random.normal(xkey, (N, nc, crop_size, crop_size), jnp.float32)
    cls = jax.random.randint(lkey, (N,), 0, num_classes)
    labels = jax.nn.one_hot(cls, num_classes, dtype=jnp.float32).reshape(
        N, num_classes, 1, 1
    )

    out = discriminator_forward_conditional(ops, x, labels)
    out = jax.block_until_ready(out)
    assert out.shape == (N,)

    ref = jax.block_until_ready(_reference_forward(params, x, labels))
    assert bool(jnp.allclose(out, ref, atol=5e-3, rtol=0.0)), (out, ref)

    print("KERNEL_OK")
</pallas_src>

<mosaic_0001>
module attributes {stable_mosaic.version = 11 : i64} {
  func.func @_disc_fused_kernel(%arg0: i32, %arg1: memref<8x1792xf32, #tpu.memory_space<vmem>>, %arg2: memref<1792x512xf32, #tpu.memory_space<vmem>>, %arg3: memref<512x256xf32, #tpu.memory_space<vmem>>, %arg4: memref<1x256xf32, #tpu.memory_space<vmem>>, %arg5: memref<256x1xf32, #tpu.memory_space<vmem>>, %arg6: memref<8x1xf32, #tpu.memory_space<vmem>>) attributes {dimension_semantics = [#tpu.dimension_semantics<parallel>], iteration_bounds = array<i64: 1>, scalar_prefetch = 0 : i64, scratch_operands = 0 : i64, tpu.core_type = #tpu.core_type<tc>, window_params = [{transform_indices = @transform_0, window_bounds = array<i64: 8, 1792>}, {pipeline_mode = #tpu.pipeline_mode<synchronous>, transform_indices = @transform_1, window_bounds = array<i64: 1792, 512>}, {pipeline_mode = #tpu.pipeline_mode<synchronous>, transform_indices = @transform_2, window_bounds = array<i64: 512, 256>}, {pipeline_mode = #tpu.pipeline_mode<synchronous>, transform_indices = @transform_3, window_bounds = array<i64: 1, 256>}, {pipeline_mode = #tpu.pipeline_mode<synchronous>, transform_indices = @transform_4, window_bounds = array<i64: 256, 1>}, {transform_indices = @transform_5, window_bounds = array<i64: 8, 1>}]} {
    %c0 = arith.constant 0 : index
    %c0_0 = arith.constant 0 : index
    %0 = vector.load %arg1[%c0, %c0_0] : memref<8x1792xf32, #tpu.memory_space<vmem>>, vector<8x1792xf32>
    %c0_1 = arith.constant 0 : index
    %c0_2 = arith.constant 0 : index
    %1 = vector.load %arg2[%c0_1, %c0_2] : memref<1792x512xf32, #tpu.memory_space<vmem>>, vector<1792x512xf32>
    %cst = arith.constant dense<0.000000e+00> : vector<8x512xf32>
    %2 = tpu.matmul %0, %1, %cst {dimension_numbers = #tpu.dot_dimension_numbers<[1], [0], [0], [1], [0, 0, 1, 1], [], []>} : vector<8x1792xf32>, vector<1792x512xf32>, vector<8x512xf32> -> vector<8x512xf32>
    %cst_3 = arith.constant 0.000000e+00 : f32
    %3 = vector.broadcast %cst_3 : f32 to vector<8x512xf32>
    %4 = arith.cmpf ogt, %2, %3 : vector<8x512xf32>
    %cst_4 = arith.constant 2.000000e-01 : f32
    %5 = vector.broadcast %cst_4 : f32 to vector<8x512xf32>
    %6 = arith.mulf %5, %2 : vector<8x512xf32>
    %7 = arith.select %4, %2, %6 : vector<8x512xi1>, vector<8x512xf32>
    %c0_5 = arith.constant 0 : index
    %c0_6 = arith.constant 0 : index
    %8 = vector.load %arg3[%c0_5, %c0_6] : memref<512x256xf32, #tpu.memory_space<vmem>>, vector<512x256xf32>
    %cst_7 = arith.constant dense<0.000000e+00> : vector<8x256xf32>
    %9 = tpu.matmul %7, %8, %cst_7 {dimension_numbers = #tpu.dot_dimension_numbers<[1], [0], [0], [1], [0, 0, 1, 1], [], []>} : vector<8x512xf32>, vector<512x256xf32>, vector<8x256xf32> -> vector<8x256xf32>
    %c0_8 = arith.constant 0 : index
    %c0_9 = arith.constant 0 : index
    %10 = vector.load %arg4[%c0_8, %c0_9] : memref<1x256xf32, #tpu.memory_space<vmem>>, vector<1x256xf32>
    %11 = vector.broadcast %10 : vector<1x256xf32> to vector<8x256xf32>
    %12 = arith.addf %9, %11 : vector<8x256xf32>
    %cst_10 = arith.constant 0.000000e+00 : f32
    %13 = vector.broadcast %cst_10 : f32 to vector<8x256xf32>
    %14 = arith.cmpf ogt, %12, %13 : vector<8x256xf32>
    %cst_11 = arith.constant 2.000000e-01 : f32
    %15 = vector.broadcast %cst_11 : f32 to vector<8x256xf32>
    %16 = arith.mulf %15, %12 : vector<8x256xf32>
    %17 = arith.select %14, %12, %16 : vector<8x256xi1>, vector<8x256xf32>
    %c0_12 = arith.constant 0 : index
    %c0_13 = arith.constant 0 : index
    %18 = vector.load %arg5[%c0_12, %c0_13] : memref<256x1xf32, #tpu.memory_space<vmem>>, vector<256x1xf32>
    %cst_14 = arith.constant dense<0.000000e+00> : vector<8x1xf32>
    %19 = tpu.matmul %17, %18, %cst_14 {dimension_numbers = #tpu.dot_dimension_numbers<[1], [0], [0], [1], [0, 0, 1, 1], [], []>} : vector<8x256xf32>, vector<256x1xf32>, vector<8x1xf32> -> vector<8x1xf32>
    %20 = math.absf %19 : vector<8x1xf32>
    %cst_15 = arith.constant 0.000000e+00 : f32
    %21 = vector.broadcast %cst_15 : f32 to vector<8x1xf32>
    %22 = arith.subf %21, %20 : vector<8x1xf32>
    %23 = math.exp %22 : vector<8x1xf32>
    %cst_16 = arith.constant 1.000000e+00 : f32
    %24 = vector.broadcast %cst_16 : f32 to vector<8x1xf32>
    %25 = arith.addf %24, %23 : vector<8x1xf32>
    %26 = tpu.reciprocal %25 {approx = true} : vector<8x1xf32> -> vector<8x1xf32>
    %cst_17 = arith.constant 0.000000e+00 : f32
    %27 = vector.broadcast %cst_17 : f32 to vector<8x1xf32>
    %28 = arith.cmpf oge, %19, %27 : vector<8x1xf32>
    %29 = arith.mulf %23, %26 : vector<8x1xf32>
    %30 = arith.select %28, %26, %29 : vector<8x1xi1>, vector<8x1xf32>
    %c0_18 = arith.constant 0 : index
    %c0_19 = arith.constant 0 : index
    %31 = vector.load %arg6[%c0_18, %c0_19] : memref<8x1xf32, #tpu.memory_space<vmem>>, vector<8x1xf32>
    tpu.vector_store %arg6[%c0_18, %c0_19], %30 {strides = array<i32>} : memref<8x1xf32, #tpu.memory_space<vmem>>, vector<8x1xf32>,
    return
  }
  func.func @transform_0(%arg0: i32) -> (i32, i32) {
    %c0_i32 = arith.constant 0 : i32
    %c0_i32_0 = arith.constant 0 : i32
    return %arg0, %c0_i32 : i32, i32
  }
  func.func @transform_1(%arg0: i32) -> (i32, i32) {
    %c0_i32 = arith.constant 0 : i32
    %c0_i32_0 = arith.constant 0 : i32
    %c0_i32_1 = arith.constant 0 : i32
    return %c0_i32, %c0_i32_0 : i32, i32
  }
  func.func @transform_2(%arg0: i32) -> (i32, i32) {
    %c0_i32 = arith.constant 0 : i32
    %c0_i32_0 = arith.constant 0 : i32
    %c0_i32_1 = arith.constant 0 : i32
    return %c0_i32, %c0_i32_0 : i32, i32
  }
  func.func @transform_3(%arg0: i32) -> (i32, i32) {
    %c0_i32 = arith.constant 0 : i32
    %c0_i32_0 = arith.constant 0 : i32
    %c0_i32_1 = arith.constant 0 : i32
    return %c0_i32, %c0_i32_0 : i32, i32
  }
  func.func @transform_4(%arg0: i32) -> (i32, i32) {
    %c0_i32 = arith.constant 0 : i32
    %c0_i32_0 = arith.constant 0 : i32
    %c0_i32_1 = arith.constant 0 : i32
    return %c0_i32, %c0_i32_0 : i32, i32
  }
  func.func @transform_5(%arg0: i32) -> (i32, i32) {
    %c0_i32 = arith.constant 0 : i32
    %c0_i32_0 = arith.constant 0 : i32
    return %arg0, %c0_i32 : i32, i32
  }
}

</mosaic_0001>

<llo_original>
// kernel: discriminator_forward_conditional.1
$region0: #{discriminator_forward_conditional.1}
  #allocation0 [shape = 'u32[]', space=smem, size = 0x4, offset = 0x4, fixed_abs, tag = 'smem constant byte address 0x4 - core index']
  #allocation1 [shape = 'u32[144,128]{1,0:T(1,128)}', space=vmem, size = 0x12000, scoped, tag = 'internal scratch']
  %s0 = inlined_call_operand.vmem [shape: f32[8,1792], index: 0, kind: input, shape index: {}]
  %s1 = inlined_call_operand.hbm [shape: f32[1792,512], index: 1, kind: input, shape index: {}]
  %s2 = inlined_call_operand.hbm [shape: f32[512,256], index: 2, kind: input, shape index: {}]
  %s3 = inlined_call_operand.hbm [shape: f32[1,256], index: 3, kind: input, shape index: {}]
  %s4 = inlined_call_operand.vmem [shape: f32[256,1], index: 4, kind: input, shape index: {}]
  %s5 = inlined_call_operand.vmem [shape: f32[8,1], index: 5, kind: output, shape index: {}]
  %s6 = sld [smem:[#allocation0]]
  $region42: #{discriminator_forward_conditional.1} parent=0
    _
  %s8 = ssub.s32 1, %s6
  %s9 = scalar_select 0, %s8, %s6
  $region1: #{discriminator_forward_conditional.1} parent=0
    #allocation2 [shape = 'u8[3670016]{0}', space=vmem, size = 0x380000, scoped, tag = 'input window, operand 1, single buffered']
    #allocation3 [shape = 's32[1]{0}', space=sflag, size = 0x4, scoped, tag = 'scoped memory for discriminator_forward_conditional.1']
    #allocation4 [shape = 'u8[524288]{0}', space=vmem, size = 0x80000, scoped, tag = 'input window, operand 2, single buffered']
    #allocation5 [shape = 's32[1]{0}', space=sflag, size = 0x4, scoped, tag = 'scoped memory for discriminator_forward_conditional.1']
    #allocation6 [shape = 'u8[1024]{0}', space=vmem, size = 0x400, scoped, tag = 'input window, operand 3, single buffered']
    %10 = vsyncpa [#allocation3], 0
    %11 = vsyncpa [#allocation5], 0
    // Predicated region
    $region2: #{discriminator_forward_conditional.1} parent=1 // pred_check
      _
    $region3: #{discriminator_forward_conditional.1} parent=1 // pred_check_branch
      %13 = sbr.rel (0) target = $region5
    $region4: #{discriminator_forward_conditional.1} parent=1 // pred_region
      _
    $region5: #{discriminator_forward_conditional.1} parent=1 // pred_fallthru
      _
    // Predicated region
    $region6: #{discriminator_forward_conditional.1} parent=1 // pred_check
      _
    $region7: #{discriminator_forward_conditional.1} parent=1 // pred_check_branch
      %15 = sbr.rel (0) target = $region9
    $region8: #{discriminator_forward_conditional.1} parent=1 // pred_region
      %s17 = ssub.s32 114688, 114688
      %18 = vsyncadd [#allocation3], %s17
      %s19 = sshll.u32 [#allocation2], 4
      %s20 = int_to_ptr.vmem [resolvable:$true] %s19
      %25 = dma.hbm_to_vmem [thread:$0]  %s1, 114688, %s20, [#allocation3], 512, 512, 32
    $region9: #{discriminator_forward_conditional.1} parent=1 // pred_fallthru
      _
    // Predicated region
    $region10: #{discriminator_forward_conditional.1} parent=1 // pred_check
      _
    $region11: #{discriminator_forward_conditional.1} parent=1 // pred_check_branch
      %27 = sbr.rel (0) target = $region13
    $region12: #{discriminator_forward_conditional.1} parent=1 // pred_region
      %s29 = ssub.s32 16384, 16384
      %30 = vsyncadd [#allocation5], %s29
      %s31 = sshll.u32 [#allocation4], 4
      %s32 = int_to_ptr.vmem [resolvable:$true] %s31
      %37 = dma.hbm_to_vmem [thread:$0]  %s2, 16384, %s32, [#allocation5], 256, 256, 16
    $region13: #{discriminator_forward_conditional.1} parent=1 // pred_fallthru
      _
    // Predicated region
    $region14: #{discriminator_forward_conditional.1} parent=1 // pred_check
      _
    $region15: #{discriminator_forward_conditional.1} parent=1 // pred_check_branch
      %39 = sbr.rel (0) target = $region17
    $region16: #{discriminator_forward_conditional.1} parent=1 // pred_region
      %s41 = ssub.s32 32, 32
      %42 = vsyncadd [#allocation5], %s41
      %s44 = sshll.u32 [#allocation6], 4
      %s45 = int_to_ptr.vmem [resolvable:$true] %s44
      %47 = dma.hbm_to_vmem [thread:$0]  %s3, 32, %s45, [#allocation5]
    $region17: #{discriminator_forward_conditional.1} parent=1 // pred_fallthru
      _
    // Predicated region
    $region18: #{discriminator_forward_conditional.1} parent=1 // pred_check
      _
    $region19: #{discriminator_forward_conditional.1} parent=1 // pred_check_branch
      %49 = sbr.rel (0) target = $region21
    $region20: #{discriminator_forward_conditional.1} parent=1 // pred_region
      _
    $region21: #{discriminator_forward_conditional.1} parent=1 // pred_fallthru
      _
    // Predicated region
    $region22: #{discriminator_forward_conditional.1} parent=1 // pred_check
      _
    $region23: #{discriminator_forward_conditional.1} parent=1 // pred_check_branch
      %51 = sbr.rel (0) target = $region25
    $region24: #{discriminator_forward_conditional.1} parent=1 // pred_region
      %52 = dma.done [#allocation3], 114688
    $region25: #{discriminator_forward_conditional.1} parent=1 // pred_fallthru
      _
    // Predicated region
    $region26: #{discriminator_forward_conditional.1} parent=1 // pred_check
      _
    $region27: #{discriminator_forward_conditional.1} parent=1 // pred_check_branch
      %54 = sbr.rel (0) target = $region29
    $region28: #{discriminator_forward_conditional.1} parent=1 // pred_region
      %55 = dma.done [#allocation5], 16384
    $region29: #{discriminator_forward_conditional.1} parent=1 // pred_fallthru
      _
    // Predicated region
    $region30: #{discriminator_forward_conditional.1} parent=1 // pred_check
      _
    $region31: #{discriminator_forward_conditional.1} parent=1 // pred_check_branch
      %57 = sbr.rel (0) target = $region33
    $region32: #{discriminator_forward_conditional.1} parent=1 // pred_region
      %58 = dma.done [#allocation5], 32
    $region33: #{discriminator_forward_conditional.1} parent=1 // pred_fallthru
      _
    %v59 = vld [vmem:[%s0] sm:$0xff]
    %v60 = vld [vmem:[%s0 + $0x8] sm:$0xff]
    %v61 = vld [vmem:[%s0 + $0x10] sm:$0xff]
    %v62 = vld [vmem:[%s0 + $0x18] sm:$0xff]
    %v63 = vld [vmem:[%s0 + $0x20] sm:$0xff]
    %v64 = vld [vmem:[%s0 + $0x28] sm:$0xff]
    %v65 = vld [vmem:[%s0 + $0x30] sm:$0xff]
    %v66 = vld [vmem:[%s0 + $0x38] sm:$0xff]
    %v67 = vld [vmem:[%s0 + $0x40] sm:$0xff]
    %v68 = vld [vmem:[%s0 + $0x48] sm:$0xff]
    %v69 = vld [vmem:[%s0 + $0x50] sm:$0xff]
    %v70 = vld [vmem:[%s0 + $0x58] sm:$0xff]
    %v71 = vld [vmem:[%s0 + $0x60] sm:$0xff]
    %v72 = vld [vmem:[%s0 + $0x68] sm:$0xff]
    %v73 = vld [vmem:[#allocation2] sm:$0xff]
    %v74 = vld [vmem:[#allocation2 + $0x8] sm:$0xff]
    %v75 = vld [vmem:[#allocation2 + $0x10] sm:$0xff]
    %v76 = vld [vmem:[#allocation2 + $0x18] sm:$0xff]
    %v77 = vld [vmem:[#allocation2 + $0x20] sm:$0xff]
    %v78 = vld [vmem:[#allocation2 + $0x28] sm:$0xff]
    %v79 = vld [vmem:[#allocation2 + $0x30] sm:$0xff]
    %v80 = vld [vmem:[#allocation2 + $0x38] sm:$0xff]
    %v81 = vld [vmem:[#allocation2 + $0x40] sm:$0xff]
    %v82 = vld [vmem:[#allocation2 + $0x48] sm:$0xff]
    %v83 = vld [vmem:[#allocation2 + $0x50] sm:$0xff]
    %v84 = vld [vmem:[#allocation2 + $0x58] sm:$0xff]
    %v85 = vld [vmem:[#allocation2 + $0x60] sm:$0xff]
    %v86 = vld [vmem:[#allocation2 + $0x68] sm:$0xff]
    %v87 = vld [vmem:[#allocation2 + $0x70] sm:$0xff]
    %v88 = vld [vmem:[#allocation2 + $0x78] sm:$0xff]
    %v89 = vld [vmem:[#allocation2 + $0x80] sm:$0xff]
    %v90 = vld [vmem:[#allocation2 + $0x88] sm:$0xff]
    %v91 = vld [vmem:[#allocation2 + $0x90] sm:$0xff]
    %v92 = vld [vmem:[#allocation2 + $0x98] sm:$0xff]
    %v93 = vld [vmem:[#allocation2 + $0xa0] sm:$0xff]
    %v94 = vld [vmem:[#allocation2 + $0xa8] sm:$0xff]
    %v95 = vld [vmem:[#allocation2 + $0xb0] sm:$0xff]
    %v96 = vld [vmem:[#allocation2 + $0xb8] sm:$0xff]
    %v97 = vld [vmem:[#allocation2 + $0xc0] sm:$0xff]
    %v98 = vld [vmem:[#allocation2 + $0xc8] sm:$0xff]
    %v99 = vld [vmem:[#allocation2 + $0xd0] sm:$0xff]
    %v100 = vld [vmem:[#allocation2 + $0xd8] sm:$0xff]
    %v101 = vld [vmem:[#allocation2 + $0xe0] sm:$0xff]
    %v102 = vld [vmem:[#allocation2 + $0xe8] sm:$0xff]
    %v103 = vld [vmem:[#allocation2 + $0xf0] sm:$0xff]
    %v104 = vld [vmem:[#allocation2 + $0xf8] sm:$0xff]
    %v105 = vld [vmem:[#allocation2 + $0x100] sm:$0xff]
    %v106 = vld [vmem:[#allocation2 + $0x108] sm:$0xff]
    %v107 = vld [vmem:[#allocation2 + $0x110] sm:$0xff]
    %v108 = vld [vmem:[#allocation2 + $0x118] sm:$0xff]
    %v109 = vld [vmem:[#allocation2 + $0x120] sm:$0xff]
    %v110 = vld [vmem:[#allocation2 + $0x128] sm:$0xff]
    %v111 = vld [vmem:[#allocation2 + $0x130] sm:$0xff]
    %v112 = vld [vmem:[#allocation2 + $0x138] sm:$0xff]
    %v113 = vld [vmem:[#allocation2 + $0x140] sm:$0xff]
    %v114 = vld [vmem:[#allocation2 + $0x148] sm:$0xff]
    %v115 = vld [vmem:[#allocation2 + $0x150] sm:$0xff]
    %v116 = vld [vmem:[#allocation2 + $0x158] sm:$0xff]
    %v117 = vld [vmem:[#allocation2 + $0x160] sm:$0xff]
    %v118 = vld [vmem:[#allocation2 + $0x168] sm:$0xff]
    %v119 = vld [vmem:[#allocation2 + $0x170] sm:$0xff]
    %v120 = vld [vmem:[#allocation2 + $0x178] sm:$0xff]
    %v121 = vld [vmem:[#allocation2 + $0x180] sm:$0xff]
    %v122 = vld [vmem:[#allocation2 + $0x188] sm:$0xff]
    %v123 = vld [vmem:[#allocation2 + $0x190] sm:$0xff]
    %v124 = vld [vmem:[#allocation2 + $0x198] sm:$0xff]
    %v125 = vld [vmem:[#allocation2 + $0x1a0] sm:$0xff]
    %v126 = vld [vmem:[#allocation2 + $0x1a8] sm:$0xff]
    %v127 = vld [vmem:[#allocation2 + $0x1b0] sm:$0xff]
    %v128 = vld [vmem:[#allocation2 + $0x1b8] sm:$0xff]
    %v129 = vld [vmem:[#allocation2 + $0x1c0] sm:$0xff]
    %v130 = vld [vmem:[#allocation2 + $0x1c8] sm:$0xff]
    %v131 = vld [vmem:[#allocation2 + $0x1d0] sm:$0xff]
    %v132 = vld [vmem:[#allocation2 + $0x1d8] sm:$0xff]
    %v133 = vld [vmem:[#allocation2 + $0x1e0] sm:$0xff]
    %v134 = vld [vmem:[#allocation2 + $0x1e8] sm:$0xff]
    %v135 = vld [vmem:[#allocation2 + $0x1f0] sm:$0xff]
    %v136 = vld [vmem:[#allocation2 + $0x1f8] sm:$0xff]
    %v137 = vld [vmem:[#allocation2 + $0x200] sm:$0xff]
    %v138 = vld [vmem:[#allocation2 + $0x208] sm:$0xff]
    %v139 = vld [vmem:[#allocation2 + $0x210] sm:$0xff]
    %v140 = vld [vmem:[#allocation2 + $0x218] sm:$0xff]
    %v141 = vld [vmem:[#allocation2 + $0x220] sm:$0xff]
    %v142 = vld [vmem:[#allocation2 + $0x228] sm:$0xff]
    %v143 = vld [vmem:[#allocation2 + $0x230] sm:$0xff]
    %v144 = vld [vmem:[#allocation2 + $0x238] sm:$0xff]
    %v145 = vld [vmem:[#allocation2 + $0x240] sm:$0xff]
    %v146 = vld [vmem:[#allocation2 + $0x248] sm:$0xff]
    %v147 = vld [vmem:[#allocation2 + $0x250] sm:$0xff]
    %v148 = vld [vmem:[#allocation2 + $0x258] sm:$0xff]
    %v149 = vld [vmem:[#allocation2 + $0x260] sm:$0xff]
    %v150 = vld [vmem:[#allocation2 + $0x268] sm:$0xff]
    %v151 = vld [vmem:[#allocation2 + $0x270] sm:$0xff]
    %v152 = vld [vmem:[#allocation2 + $0x278] sm:$0xff]
    %v153 = vld [vmem:[#allocation2 + $0x280] sm:$0xff]
    %v154 = vld [vmem:[#allocation2 + $0x288] sm:$0xff]
    %v155 = vld [vmem:[#allocation2 + $0x290] sm:$0xff]
    %v156 = vld [vmem:[#allocation2 + $0x298] sm:$0xff]
    %v157 = vld [vmem:[#allocation2 + $0x2a0] sm:$0xff]
    %v158 = vld [vmem:[#allocation2 + $0x2a8] sm:$0xff]
    %v159 = vld [vmem:[#allocation2 + $0x2b0] sm:$0xff]
    %v160 = vld [vmem:[#allocation2 + $0x2b8] sm:$0xff]
    %v161 = vld [vmem:[#allocation2 + $0x2c0] sm:$0xff]
    %v162 = vld [vmem:[#allocation2 + $0x2c8] sm:$0xff]
    %v163 = vld [vmem:[#allocation2 + $0x2d0] sm:$0xff]
    %v164 = vld [vmem:[#allocation2 + $0x2d8] sm:$0xff]
    %v165 = vld [vmem:[#allocation2 + $0x2e0] sm:$0xff]
    %v166 = vld [vmem:[#allocation2 + $0x2e8] sm:$0xff]
    %v167 = vld [vmem:[#allocation2 + $0x2f0] sm:$0xff]
    %v168 = vld [vmem:[#allocation2 + $0x2f8] sm:$0xff]
    %v169 = vld [vmem:[#allocation2 + $0x300] sm:$0xff]
    %v170 = vld [vmem:[#allocation2 + $0x308] sm:$0xff]
    %v171 = vld [vmem:[#allocation2 + $0x310] sm:$0xff]
    %v172 = vld [vmem:[#allocation2 + $0x318] sm:$0xff]
    %v173 = vld [vmem:[#allocation2 + $0x320] sm:$0xff]
    %v174 = vld [vmem:[#allocation2 + $0x328] sm:$0xff]
    %v175 = vld [vmem:[#allocation2 + $0x330] sm:$0xff]
    %v176 = vld [vmem:[#allocation2 + $0x338] sm:$0xff]
    %v177 = vld [vmem:[#allocation2 + $0x340] sm:$0xff]
    %v178 = vld [vmem:[#allocation2 + $0x348] sm:$0xff]
    %v179 = vld [vmem:[#allocation2 + $0x350] sm:$0xff]
    %v180 = vld [vmem:[#allocation2 + $0x358] sm:$0xff]
    %v181 = vld [vmem:[#allocation2 + $0x360] sm:$0xff]
    %v182 = vld [vmem:[#allocation2 + $0x368] sm:$0xff]
    %v183 = vld [vmem:[#allocation2 + $0x370] sm:$0xff]
    %v184 = vld [vmem:[#allocation2 + $0x378] sm:$0xff]
    %v185 = vld [vmem:[#allocation2 + $0x380] sm:$0xff]
    %v186 = vld [vmem:[#allocation2 + $0x388] sm:$0xff]
    %v187 = vld [vmem:[#allocation2 + $0x390] sm:$0xff]
    %v188 = vld [vmem:[#allocation2 + $0x398] sm:$0xff]
    %v189 = vld [vmem:[#allocation2 + $0x3a0] sm:$0xff]
    %v190 = vld [vmem:[#allocation2 + $0x3a8] sm:$0xff]
    %v191 = vld [vmem:[#allocation2 + $0x3b0] sm:$0xff]
    %v192 = vld [vmem:[#allocation2 + $0x3b8] sm:$0xff]
    %v193 = vld [vmem:[#allocation2 + $0x3c0] sm:$0xff]
    %v194 = vld [vmem:[#allocation2 + $0x3c8] sm:$0xff]
    %v195 = vld [vmem:[#allocation2 + $0x3d0] sm:$0xff]
    %v196 = vld [vmem:[#allocation2 + $0x3d8] sm:$0xff]
    %v197 = vld [vmem:[#allocation2 + $0x3e0] sm:$0xff]
    %v198 = vld [vmem:[#allocation2 + $0x3e8] sm:$0xff]
    %v199 = vld [vmem:[#allocation2 + $0x3f0] sm:$0xff]
    %v200 = vld [vmem:[#allocation2 + $0x3f8] sm:$0xff]
    %v201 = vld [vmem:[#allocation2 + $0x400] sm:$0xff]
    %v202 = vld [vmem:[#allocation2 + $0x408] sm:$0xff]
    %v203 = vld [vmem:[#allocation2 + $0x410] sm:$0xff]
    %v204 = vld [vmem:[#allocation2 + $0x418] sm:$0xff]
    %v205 = vld [vmem:[#allocation2 + $0x420] sm:$0xff]
    %v206 = vld [vmem:[#allocation2 + $0x428] sm:$0xff]
    %v207 = vld [vmem:[#allocation2 + $0x430] sm:$0xff]
    %v208 = vld [vmem:[#allocation2 + $0x438] sm:$0xff]
    %v209 = vld [vmem:[#allocation2 + $0x440] sm:$0xff]
    %v210 = vld [vmem:[#allocation2 + $0x448] sm:$0xff]
    %v211 = vld [vmem:[#allocation2 + $0x450] sm:$0xff]
    %v212 = vld [vmem:[#allocation2 + $0x458] sm:$0xff]
    %v213 = vld [vmem:[#allocation2 + $0x460] sm:$0xff]
    %v214 = vld [vmem:[#allocation2 + $0x468] sm:$0xff]
    %v215 = vld [vmem:[#allocation2 + $0x470] sm:$0xff]
    %v216 = vld [vmem:[#allocation2 + $0x478] sm:$0xff]
    %v217 = vld [vmem:[#allocation2 + $0x480] sm:$0xff]
    %v218 = vld [vmem:[#allocation2 + $0x488] sm:$0xff]
    %v219 = vld [vmem:[#allocation2 + $0x490] sm:$0xff]
    %v220 = vld [vmem:[#allocation2 + $0x498] sm:$0xff]
    %v221 = vld [vmem:[#allocation2 + $0x4a0] sm:$0xff]
    %v222 = vld [vmem:[#allocation2 + $0x4a8] sm:$0xff]
    %v223 = vld [vmem:[#allocation2 + $0x4b0] sm:$0xff]
    %v224 = vld [vmem:[#allocation2 + $0x4b8] sm:$0xff]
    %v225 = vld [vmem:[#allocation2 + $0x4c0] sm:$0xff]
    %v226 = vld [vmem:[#allocation2 + $0x4c8] sm:$0xff]
    %v227 = vld [vmem:[#allocation2 + $0x4d0] sm:$0xff]
    %v228 = vld [vmem:[#allocation2 + $0x4d8] sm:$0xff]
    %v229 = vld [vmem:[#allocation2 + $0x4e0] sm:$0xff]
    %v230 = vld [vmem:[#allocation2 + $0x4e8] sm:$0xff]
    %v231 = vld [vmem:[#allocation2 + $0x4f0] sm:$0xff]
    %v232 = vld [vmem:[#allocation2 + $0x4f8] sm:$0xff]
    %v233 = vld [vmem:[#allocation2 + $0x500] sm:$0xff]
    %v234 = vld [vmem:[#allocation2 + $0x508] sm:$0xff]
    %v235 = vld [vmem:[#allocation2 + $0x510] sm:$0xff]
    %v236 = vld [vmem:[#allocation2 + $0x518] sm:$0xff]
    %v237 = vld [vmem:[#allocation2 + $0x520] sm:$0xff]
    %v238 = vld [vmem:[#allocation2 + $0x528] sm:$0xff]
    %v239 = vld [vmem:[#allocation2 + $0x530] sm:$0xff]
    %v240 = vld [vmem:[#allocation2 + $0x538] sm:$0xff]
    %v241 = vld [vmem:[#allocation2 + $0x540] sm:$0xff]
    %v242 = vld [vmem:[#allocation2 + $0x548] sm:$0xff]
    %v243 = vld [vmem:[#allocation2 + $0x550] sm:$0xff]
    %v244 = vld [vmem:[#allocation2 + $0x558] sm:$0xff]
    %v245 = vld [vmem:[#allocation2 + $0x560] sm:$0xff]
    %v246 = vld [vmem:[#allocation2 + $0x568] sm:$0xff]
    %v247 = vld [vmem:[#allocation2 + $0x570] sm:$0xff]
    %v248 = vld [vmem:[#allocation2 + $0x578] sm:$0xff]
    %v249 = vld [vmem:[#allocation2 + $0x580] sm:$0xff]
    %v250 = vld [vmem:[#allocation2 + $0x588] sm:$0xff]
    %v251 = vld [vmem:[#allocation2 + $0x590] sm:$0xff]
    %v252 = vld [vmem:[#allocation2 + $0x598] sm:$0xff]
    %v253 = vld [vmem:[#allocation2 + $0x5a0] sm:$0xff]
    %v254 = vld [vmem:[#allocation2 + $0x5a8] sm:$0xff]
    %v255 = vld [vmem:[#allocation2 + $0x5b0] sm:$0xff]
    %v256 = vld [vmem:[#allocation2 + $0x5b8] sm:$0xff]
    %v257 = vld [vmem:[#allocation2 + $0x5c0] sm:$0xff]
    %v258 = vld [vmem:[#allocation2 + $0x5c8] sm:$0xff]
    %v259 = vld [vmem:[#allocation2 + $0x5d0] sm:$0xff]
    %v260 = vld [vmem:[#allocation2 + $0x5d8] sm:$0xff]
    %v261 = vld [vmem:[#allocation2 + $0x5e0] sm:$0xff]
    %v262 = vld [vmem:[#allocation2 + $0x5e8] sm:$0xff]
    %v263 = vld [vmem:[#allocation2 + $0x5f0] sm:$0xff]
    %v264 = vld [vmem:[#allocation2 + $0x5f8] sm:$0xff]
    %v265 = vld [vmem:[#allocation2 + $0x600] sm:$0xff]
    %v266 = vld [vmem:[#allocation2 + $0x608] sm:$0xff]
    %v267 = vld [vmem:[#allocation2 + $0x610] sm:$0xff]
    %v268 = vld [vmem:[#allocation2 + $0x618] sm:$0xff]
    %v269 = vld [vmem:[#allocation2 + $0x620] sm:$0xff]
    %v270 = vld [vmem:[#allocation2 + $0x628] sm:$0xff]
    %v271 = vld [vmem:[#allocation2 + $0x630] sm:$0xff]
    %v272 = vld [vmem:[#allocation2 + $0x638] sm:$0xff]
    %v273 = vld [vmem:[#allocation2 + $0x640] sm:$0xff]
    %v274 = vld [vmem:[#allocation2 + $0x648] sm:$0xff]
    %v275 = vld [vmem:[#allocation2 + $0x650] sm:$0xff]
    %v276 = vld [vmem:[#allocation2 + $0x658] sm:$0xff]
    %v277 = vld [vmem:[#allocation2 + $0x660] sm:$0xff]
    %v278 = vld [vmem:[#allocation2 + $0x668] sm:$0xff]
    %v279 = vld [vmem:[#allocation2 + $0x670] sm:$0xff]
    %v280 = vld [vmem:[#allocation2 + $0x678] sm:$0xff]
    %v281 = vld [vmem:[#allocation2 + $0x680] sm:$0xff]
    %v282 = vld [vmem:[#allocation2 + $0x688] sm:$0xff]
    %v283 = vld [vmem:[#allocation2 + $0x690] sm:$0xff]
    %v284 = vld [vmem:[#allocation2 + $0x698] sm:$0xff]
    %v285 = vld [vmem:[#allocation2 + $0x6a0] sm:$0xff]
    %v286 = vld [vmem:[#allocation2 + $0x6a8] sm:$0xff]
    %v287 = vld [vmem:[#allocation2 + $0x6b0] sm:$0xff]
    %v288 = vld [vmem:[#allocation2 + $0x6b8] sm:$0xff]
    %v289 = vld [vmem:[#allocation2 + $0x6c0] sm:$0xff]
    %v290 = vld [vmem:[#allocation2 + $0x6c8] sm:$0xff]
    %v291 = vld [vmem:[#allocation2 + $0x6d0] sm:$0xff]
    %v292 = vld [vmem:[#allocation2 + $0x6d8] sm:$0xff]
    %v293 = vld [vmem:[#allocation2 + $0x6e0] sm:$0xff]
    %v294 = vld [vmem:[#allocation2 + $0x6e8] sm:$0xff]
    %v295 = vld [vmem:[#allocation2 + $0x6f0] sm:$0xff]
    %v296 = vld [vmem:[#allocation2 + $0x6f8] sm:$0xff]
    %v297 = vld [vmem:[#allocation2 + $0x700] sm:$0xff]
    %v298 = vld [vmem:[#allocation2 + $0x708] sm:$0xff]
    %v299 = vld [vmem:[#allocation2 + $0x710] sm:$0xff]
    %v300 = vld [vmem:[#allocation2 + $0x718] sm:$0xff]
    %v301 = vld [vmem:[#allocation2 + $0x720] sm:$0xff]
    %v302 = vld [vmem:[#allocation2 + $0x728] sm:$0xff]
    %v303 = vld [vmem:[#allocation2 + $0x730] sm:$0xff]
    %v304 = vld [vmem:[#allocation2 + $0x738] sm:$0xff]
    %v305 = vld [vmem:[#allocation2 + $0x740] sm:$0xff]
    %v306 = vld [vmem:[#allocation2 + $0x748] sm:$0xff]
    %v307 = vld [vmem:[#allocation2 + $0x750] sm:$0xff]
    %v308 = vld [vmem:[#allocation2 + $0x758] sm:$0xff]
    %v309 = vld [vmem:[#allocation2 + $0x760] sm:$0xff]
    %v310 = vld [vmem:[#allocation2 + $0x768] sm:$0xff]
    %v311 = vld [vmem:[#allocation2 + $0x770] sm:$0xff]
    %v312 = vld [vmem:[#allocation2 + $0x778] sm:$0xff]
    %v313 = vld [vmem:[#allocation2 + $0x780] sm:$0xff]
    %v314 = vld [vmem:[#allocation2 + $0x788] sm:$0xff]
    %v315 = vld [vmem:[#allocation2 + $0x790] sm:$0xff]
    %v316 = vld [vmem:[#allocation2 + $0x798] sm:$0xff]
    %v317 = vld [vmem:[#allocation2 + $0x7a0] sm:$0xff]
    %v318 = vld [vmem:[#allocation2 + $0x7a8] sm:$0xff]
    %v319 = vld [vmem:[#allocation2 + $0x7b0] sm:$0xff]
    %v320 = vld [vmem:[#allocation2 + $0x7b8] sm:$0xff]
    %v321 = vld [vmem:[#allocation2 + $0x7c0] sm:$0xff]
    %v322 = vld [vmem:[#allocation2 + $0x7c8] sm:$0xff]
    %v323 = vld [vmem:[#allocation2 + $0x7d0] sm:$0xff]
    %v324 = vld [vmem:[#allocation2 + $0x7d8] sm:$0xff]
    %v325 = vld [vmem:[#allocation2 + $0x7e0] sm:$0xff]
    %v326 = vld [vmem:[#allocation2 + $0x7e8] sm:$0xff]
    %v327 = vld [vmem:[#allocation2 + $0x7f0] sm:$0xff]
    %v328 = vld [vmem:[#allocation2 + $0x7f8] sm:$0xff]
    %v329 = vld [vmem:[#allocation2 + $0x800] sm:$0xff]
    %v330 = vld [vmem:[#allocation2 + $0x808] sm:$0xff]
    %v331 = vld [vmem:[#allocation2 + $0x810] sm:$0xff]
    %v332 = vld [vmem:[#allocation2 + $0x818] sm:$0xff]
    %v333 = vld [vmem:[#allocation2 + $0x820] sm:$0xff]
    %v334 = vld [vmem:[#allocation2 + $0x828] sm:$0xff]
    %v335 = vld [vmem:[#allocation2 + $0x830] sm:$0xff]
    %v336 = vld [vmem:[#allocation2 + $0x838] sm:$0xff]
    %v337 = vld [vmem:[#allocation2 + $0x840] sm:$0xff]
    %v338 = vld [vmem:[#allocation2 + $0x848] sm:$0xff]
    %v339 = vld [vmem:[#allocation2 + $0x850] sm:$0xff]
    %v340 = vld [vmem:[#allocation2 + $0x858] sm:$0xff]
    %v341 = vld [vmem:[#allocation2 + $0x860] sm:$0xff]
    %v342 = vld [vmem:[#allocation2 + $0x868] sm:$0xff]
    %v343 = vld [vmem:[#allocation2 + $0x870] sm:$0xff]
    %v344 = vld [vmem:[#allocation2 + $0x878] sm:$0xff]
    %v345 = vld [vmem:[#allocation2 + $0x880] sm:$0xff]
    %v346 = vld [vmem:[#allocation2 + $0x888] sm:$0xff]
    %v347 = vld [vmem:[#allocation2 + $0x890] sm:$0xff]
    %v348 = vld [vmem:[#allocation2 + $0x898] sm:$0xff]
    %v349 = vld [vmem:[#allocation2 + $0x8a0] sm:$0xff]
    %v350 = vld [vmem:[#allocation2 + $0x8a8] sm:$0xff]
    %v351 = vld [vmem:[#allocation2 + $0x8b0] sm:$0xff]
    %v352 = vld [vmem:[#allocation2 + $0x8b8] sm:$0xff]
    %v353 = vld [vmem:[#allocation2 + $0x8c0] sm:$0xff]
    %v354 = vld [vmem:[#allocation2 + $0x8c8] sm:$0xff]
    %v355 = vld [vmem:[#allocation2 + $0x8d0] sm:$0xff]
    %v356 = vld [vmem:[#allocation2 + $0x8d8] sm:$0xff]
    %v357 = vld [vmem:[#allocation2 + $0x8e0] sm:$0xff]
    %v358 = vld [vmem:[#allocation2 + $0x8e8] sm:$0xff]
    %v359 = vld [vmem:[#allocation2 + $0x8f0] sm:$0xff]
    %v360 = vld [vmem:[#allocation2 + $0x8f8] sm:$0xff]
    %v361 = vld [vmem:[#allocation2 + $0x900] sm:$0xff]
    %v362 = vld [vmem:[#allocation2 + $0x908] sm:$0xff]
    %v363 = vld [vmem:[#allocation2 + $0x910] sm:$0xff]
    %v364 = vld [vmem:[#allocation2 + $0x918] sm:$0xff]
    %v365 = vld [vmem:[#allocation2 + $0x920] sm:$0xff]
    %v366 = vld [vmem:[#allocation2 + $0x928] sm:$0xff]
    %v367 = vld [vmem:[#allocation2 + $0x930] sm:$0xff]
    %v368 = vld [vmem:[#allocation2 + $0x938] sm:$0xff]
    %v369 = vld [vmem:[#allocation2 + $0x940] sm:$0xff]
    %v370 = vld [vmem:[#allocation2 + $0x948] sm:$0xff]
    %v371 = vld [vmem:[#allocation2 + $0x950] sm:$0xff]
    %v372 = vld [vmem:[#allocation2 + $0x958] sm:$0xff]
    %v373 = vld [vmem:[#allocation2 + $0x960] sm:$0xff]
    %v374 = vld [vmem:[#allocation2 + $0x968] sm:$0xff]
    %v375 = vld [vmem:[#allocation2 + $0x970] sm:$0xff]
    %v376 = vld [vmem:[#allocation2 + $0x978] sm:$0xff]
    %v377 = vld [vmem:[#allocation2 + $0x980] sm:$0xff]
    %v378 = vld [vmem:[#allocation2 + $0x988] sm:$0xff]
    %v379 = vld [vmem:[#allocation2 + $0x990] sm:$0xff]
    %v380 = vld [vmem:[#allocation2 + $0x998] sm:$0xff]
    %v381 = vld [vmem:[#allocation2 + $0x9a0] sm:$0xff]
    %v382 = vld [vmem:[#allocation2 + $0x9a8] sm:$0xff]
    %v383 = vld [vmem:[#allocation2 + $0x9b0] sm:$0xff]
    %v384 = vld [vmem:[#allocation2 + $0x9b8] sm:$0xff]
    %v385 = vld [vmem:[#allocation2 + $0x9c0] sm:$0xff]
    %v386 = vld [vmem:[#allocation2 + $0x9c8] sm:$0xff]
    %v387 = vld [vmem:[#allocation2 + $0x9d0] sm:$0xff]
    %v388 = vld [vmem:[#allocation2 + $0x9d8] sm:$0xff]
    %v389 = vld [vmem:[#allocation2 + $0x9e0] sm:$0xff]
    %v390 = vld [vmem:[#allocation2 + $0x9e8] sm:$0xff]
    %v391 = vld [vmem:[#allocation2 + $0x9f0] sm:$0xff]
    %v392 = vld [vmem:[#allocation2 + $0x9f8] sm:$0xff]
    %v393 = vld [vmem:[#allocation2 + $0xa00] sm:$0xff]
    %v394 = vld [vmem:[#allocation2 + $0xa08] sm:$0xff]
    %v395 = vld [vmem:[#allocation2 + $0xa10] sm:$0xff]
    %v396 = vld [vmem:[#allocation2 + $0xa18] sm:$0xff]
    %v397 = vld [vmem:[#allocation2 + $0xa20] sm:$0xff]
    %v398 = vld [vmem:[#allocation2 + $0xa28] sm:$0xff]
    %v399 = vld [vmem:[#allocation2 + $0xa30] sm:$0xff]
    %v400 = vld [vmem:[#allocation2 + $0xa38] sm:$0xff]
    %v401 = vld [vmem:[#allocation2 + $0xa40] sm:$0xff]
    %v402 = vld [vmem:[#allocation2 + $0xa48] sm:$0xff]
    %v403 = vld [vmem:[#allocation2 + $0xa50] sm:$0xff]
    %v404 = vld [vmem:[#allocation2 + $0xa58] sm:$0xff]
    %v405 = vld [vmem:[#allocation2 + $0xa60] sm:$0xff]
    %v406 = vld [vmem:[#allocation2 + $0xa68] sm:$0xff]
    %v407 = vld [vmem:[#allocation2 + $0xa70] sm:$0xff]
    %v408 = vld [vmem:[#allocation2 + $0xa78] sm:$0xff]
    %v409 = vld [vmem:[#allocation2 + $0xa80] sm:$0xff]
    %v410 = vld [vmem:[#allocation2 + $0xa88] sm:$0xff]
    %v411 = vld [vmem:[#allocation2 + $0xa90] sm:$0xff]
    %v412 = vld [vmem:[#allocation2 + $0xa98] sm:$0xff]
    %v413 = vld [vmem:[#allocation2 + $0xaa0] sm:$0xff]
    %v414 = vld [vmem:[#allocation2 + $0xaa8] sm:$0xff]
    %v415 = vld [vmem:[#allocation2 + $0xab0] sm:$0xff]
    %v416 = vld [vmem:[#allocation2 + $0xab8] sm:$0xff]
    %v417 = vld [vmem:[#allocation2 + $0xac0] sm:$0xff]
    %v418 = vld [vmem:[#allocation2 + $0xac8] sm:$0xff]
    %v419 = vld [vmem:[#allocation2 + $0xad0] sm:$0xff]
    %v420 = vld [vmem:[#allocation2 + $0xad8] sm:$0xff]
    %v421 = vld [vmem:[#allocation2 + $0xae0] sm:$0xff]
    %v422 = vld [vmem:[#allocation2 + $0xae8] sm:$0xff]
    %v423 = vld [vmem:[#allocation2 + $0xaf0] sm:$0xff]
    %v424 = vld [vmem:[#allocation2 + $0xaf8] sm:$0xff]
    %v425 = vld [vmem:[#allocation2 + $0xb00] sm:$0xff]
    %v426 = vld [vmem:[#allocation2 + $0xb08] sm:$0xff]
    %v427 = vld [vmem:[#allocation2 + $0xb10] sm:$0xff]
    %v428 = vld [vmem:[#allocation2 + $0xb18] sm:$0xff]
    %v429 = vld [vmem:[#allocation2 + $0xb20] sm:$0xff]
    %v430 = vld [vmem:[#allocation2 + $0xb28] sm:$0xff]
    %v431 = vld [vmem:[#allocation2 + $0xb30] sm:$0xff]
    %v432 = vld [vmem:[#allocation2 + $0xb38] sm:$0xff]
    %v433 = vld [vmem:[#allocation2 + $0xb40] sm:$0xff]
    %v434 = vld [vmem:[#allocation2 + $0xb48] sm:$0xff]
    %v435 = vld [vmem:[#allocation2 + $0xb50] sm:$0xff]
    %v436 = vld [vmem:[#allocation2 + $0xb58] sm:$0xff]
    %v437 = vld [vmem:[#allocation2 + $0xb60] sm:$0xff]
    %v438 = vld [vmem:[#allocation2 + $0xb68] sm:$0xff]
    %v439 = vld [vmem:[#allocation2 + $0xb70] sm:$0xff]
    %v440 = vld [vmem:[#allocation2 + $0xb78] sm:$0xff]
    %v441 = vld [vmem:[#allocation2 + $0xb80] sm:$0xff]
    %v442 = vld [vmem:[#allocation2 + $0xb88] sm:$0xff]
    %v443 = vld [vmem:[#allocation2 + $0xb90] sm:$0xff]
    %v444 = vld [vmem:[#allocation2 + $0xb98] sm:$0xff]
    %v445 = vld [vmem:[#allocation2 + $0xba0] sm:$0xff]
    %v446 = vld [vmem:[#allocation2 + $0xba8] sm:$0xff]
    %v447 = vld [vmem:[#allocation2 + $0xbb0] sm:$0xff]
    %v448 = vld [vmem:[#allocation2 + $0xbb8] sm:$0xff]
    %v449 = vld [vmem:[#allocation2 + $0xbc0] sm:$0xff]
    %v450 = vld [vmem:[#allocation2 + $0xbc8] sm:$0xff]
    %v451 = vld [vmem:[#allocation2 + $0xbd0] sm:$0xff]
    %v452 = vld [vmem:[#allocation2 + $0xbd8] sm:$0xff]
    %v453 = vld [vmem:[#allocation2 + $0xbe0] sm:$0xff]
    %v454 = vld [vmem:[#allocation2 + $0xbe8] sm:$0xff]
    %v455 = vld [vmem:[#allocation2 + $0xbf0] sm:$0xff]
    %v456 = vld [vmem:[#allocation2 + $0xbf8] sm:$0xff]
    %v457 = vld [vmem:[#allocation2 + $0xc00] sm:$0xff]
    %v458 = vld [vmem:[#allocation2 + $0xc08] sm:$0xff]
    %v459 = vld [vmem:[#allocation2 + $0xc10] sm:$0xff]
    %v460 = vld [vmem:[#allocation2 + $0xc18] sm:$0xff]
    %v461 = vld [vmem:[#allocation2 + $0xc20] sm:$0xff]
    %v462 = vld [vmem:[#allocation2 + $0xc28] sm:$0xff]
    %v463 = vld [vmem:[#allocation2 + $0xc30] sm:$0xff]
    %v464 = vld [vmem:[#allocation2 + $0xc38] sm:$0xff]
    %v465 = vld [vmem:[#allocation2 + $0xc40] sm:$0xff]
    %v466 = vld [vmem:[#allocation2 + $0xc48] sm:$0xff]
    %v467 = vld [vmem:[#allocation2 + $0xc50] sm:$0xff]
    %v468 = vld [vmem:[#allocation2 + $0xc58] sm:$0xff]
    %v469 = vld [vmem:[#allocation2 + $0xc60] sm:$0xff]
    %v470 = vld [vmem:[#allocation2 + $0xc68] sm:$0xff]
    %v471 = vld [vmem:[#allocation2 + $0xc70] sm:$0xff]
    %v472 = vld [vmem:[#allocation2 + $0xc78] sm:$0xff]
    %v473 = vld [vmem:[#allocation2 + $0xc80] sm:$0xff]
    %v474 = vld [vmem:[#allocation2 + $0xc88] sm:$0xff]
    %v475 = vld [vmem:[#allocation2 + $0xc90] sm:$0xff]
    %v476 = vld [vmem:[#allocation2 + $0xc98] sm:$0xff]
    %v477 = vld [vmem:[#allocation2 + $0xca0] sm:$0xff]
    %v478 = vld [vmem:[#allocation2 + $0xca8] sm:$0xff]
    %v479 = vld [vmem:[#allocation2 + $0xcb0] sm:$0xff]
    %v480 = vld [vmem:[#allocation2 + $0xcb8] sm:$0xff]
    %v481 = vld [vmem:[#allocation2 + $0xcc0] sm:$0xff]
    %v482 = vld [vmem:[#allocation2 + $0xcc8] sm:$0xff]
    %v483 = vld [vmem:[#allocation2 + $0xcd0] sm:$0xff]
    %v484 = vld [vmem:[#allocation2 + $0xcd8] sm:$0xff]
    %v485 = vld [vmem:[#allocation2 + $0xce0] sm:$0xff]
    %v486 = vld [vmem:[#allocation2 + $0xce8] sm:$0xff]
    %v487 = vld [vmem:[#allocation2 + $0xcf0] sm:$0xff]
    %v488 = vld [vmem:[#allocation2 + $0xcf8] sm:$0xff]
    %v489 = vld [vmem:[#allocation2 + $0xd00] sm:$0xff]
    %v490 = vld [vmem:[#allocation2 + $0xd08] sm:$0xff]
    %v491 = vld [vmem:[#allocation2 + $0xd10] sm:$0xff]
    %v492 = vld [vmem:[#allocation2 + $0xd18] sm:$0xff]
    %v493 = vld [vmem:[#allocation2 + $0xd20] sm:$0xff]
    %v494 = vld [vmem:[#allocation2 + $0xd28] sm:$0xff]
    %v495 = vld [vmem:[#allocation2 + $0xd30] sm:$0xff]
    %v496 = vld [vmem:[#allocation2 + $0xd38] sm:$0xff]
    %v497 = vld [vmem:[#allocation2 + $0xd40] sm:$0xff]
    %v498 = vld [vmem:[#allocation2 + $0xd48] sm:$0xff]
    %v499 = vld [vmem:[#allocation2 + $0xd50] sm:$0xff]
    %v500 = vld [vmem:[#allocation2 + $0xd58] sm:$0xff]
    %v501 = vld [vmem:[#allocation2 + $0xd60] sm:$0xff]
    %v502 = vld [vmem:[#allocation2 + $0xd68] sm:$0xff]
    %v503 = vld [vmem:[#allocation2 + $0xd70] sm:$0xff]
    %v504 = vld [vmem:[#allocation2 + $0xd78] sm:$0xff]
    %v505 = vld [vmem:[#allocation2 + $0xd80] sm:$0xff]
    %v506 = vld [vmem:[#allocation2 + $0xd88] sm:$0xff]
    %v507 = vld [vmem:[#allocation2 + $0xd90] sm:$0xff]
    %v508 = vld [vmem:[#allocation2 + $0xd98] sm:$0xff]
    %v509 = vld [vmem:[#allocation2 + $0xda0] sm:$0xff]
    %v510 = vld [vmem:[#allocation2 + $0xda8] sm:$0xff]
    %v511 = vld [vmem:[#allocation2 + $0xdb0] sm:$0xff]
    %v512 = vld [vmem:[#allocation2 + $0xdb8] sm:$0xff]
    %v513 = vld [vmem:[#allocation2 + $0xdc0] sm:$0xff]
    %v514 = vld [vmem:[#allocation2 + $0xdc8] sm:$0xff]
    %v515 = vld [vmem:[#allocation2 + $0xdd0] sm:$0xff]
    %v516 = vld [vmem:[#allocation2 + $0xdd8] sm:$0xff]
    %v517 = vld [vmem:[#allocation2 + $0xde0] sm:$0xff]
    %v518 = vld [vmem:[#allocation2 + $0xde8] sm:$0xff]
    %v519 = vld [vmem:[#allocation2 + $0xdf0] sm:$0xff]
    %v520 = vld [vmem:[#allocation2 + $0xdf8] sm:$0xff]
    %v521 = vld [vmem:[#allocation2 + $0xe00] sm:$0xff]
    %v522 = vld [vmem:[#allocation2 + $0xe08] sm:$0xff]
    %v523 = vld [vmem:[#allocation2 + $0xe10] sm:$0xff]
    %v524 = vld [vmem:[#allocation2 + $0xe18] sm:$0xff]
    %v525 = vld [vmem:[#allocation2 + $0xe20] sm:$0xff]
    %v526 = vld [vmem:[#allocation2 + $0xe28] sm:$0xff]
    %v527 = vld [vmem:[#allocation2 + $0xe30] sm:$0xff]
    %v528 = vld [vmem:[#allocation2 + $0xe38] sm:$0xff]
    %v529 = vld [vmem:[#allocation2 + $0xe40] sm:$0xff]
    %v530 = vld [vmem:[#allocation2 + $0xe48] sm:$0xff]
    %v531 = vld [vmem:[#allocation2 + $0xe50] sm:$0xff]
    %v532 = vld [vmem:[#allocation2 + $0xe58] sm:$0xff]
    %v533 = vld [vmem:[#allocation2 + $0xe60] sm:$0xff]
    %v534 = vld [vmem:[#allocation2 + $0xe68] sm:$0xff]
    %v535 = vld [vmem:[#allocation2 + $0xe70] sm:$0xff]
    %v536 = vld [vmem:[#allocation2 + $0xe78] sm:$0xff]
    %v537 = vld [vmem:[#allocation2 + $0xe80] sm:$0xff]
    %v538 = vld [vmem:[#allocation2 + $0xe88] sm:$0xff]
    %v539 = vld [vmem:[#allocation2 + $0xe90] sm:$0xff]
    %v540 = vld [vmem:[#allocation2 + $0xe98] sm:$0xff]
    %v541 = vld [vmem:[#allocation2 + $0xea0] sm:$0xff]
    %v542 = vld [vmem:[#allocation2 + $0xea8] sm:$0xff]
    %v543 = vld [vmem:[#allocation2 + $0xeb0] sm:$0xff]
    %v544 = vld [vmem:[#allocation2 + $0xeb8] sm:$0xff]
    %v545 = vld [vmem:[#allocation2 + $0xec0] sm:$0xff]
    %v546 = vld [vmem:[#allocation2 + $0xec8] sm:$0xff]
    %v547 = vld [vmem:[#allocation2 + $0xed0] sm:$0xff]
    %v548 = vld [vmem:[#allocation2 + $0xed8] sm:$0xff]
    %v549 = vld [vmem:[#allocation2 + $0xee0] sm:$0xff]
    %v550 = vld [vmem:[#allocation2 + $0xee8] sm:$0xff]
    %v551 = vld [vmem:[#allocation2 + $0xef0] sm:$0xff]
    %v552 = vld [vmem:[#allocation2 + $0xef8] sm:$0xff]
    %v553 = vld [vmem:[#allocation2 + $0xf00] sm:$0xff]
    %v554 = vld [vmem:[#allocation2 + $0xf08] sm:$0xff]
    %v555 = vld [vmem:[#allocation2 + $0xf10] sm:$0xff]
    %v556 = vld [vmem:[#allocation2 + $0xf18] sm:$0xff]
    %v557 = vld [vmem:[#allocation2 + $0xf20] sm:$0xff]
    %v558 = vld [vmem:[#allocation2 + $0xf28] sm:$0xff]
    %v559 = vld [vmem:[#allocation2 + $0xf30] sm:$0xff]
    %v560 = vld [vmem:[#allocation2 + $0xf38] sm:$0xff]
    %v561 = vld [vmem:[#allocation2 + $0xf40] sm:$0xff]
    %v562 = vld [vmem:[#allocation2 + $0xf48] sm:$0xff]
    %v563 = vld [vmem:[#allocation2 + $0xf50] sm:$0xff]
    %v564 = vld [vmem:[#allocation2 + $0xf58] sm:$0xff]
    %v565 = vld [vmem:[#allocation2 + $0xf60] sm:$0xff]
    %v566 = vld [vmem:[#allocation2 + $0xf68] sm:$0xff]
    %v567 = vld [vmem:[#allocation2 + $0xf70] sm:$0xff]
    %v568 = vld [vmem:[#allocation2 + $0xf78] sm:$0xff]
    %v569 = vld [vmem:[#allocation2 + $0xf80] sm:$0xff]
    %v570 = vld [vmem:[#allocation2 + $0xf88] sm:$0xff]
    %v571 = vld [vmem:[#allocation2 + $0xf90] sm:$0xff]
    %v572 = vld [vmem:[#allocation2 + $0xf98] sm:$0xff]
    %v573 = vld [vmem:[#allocation2 + $0xfa0] sm:$0xff]
    %v574 = vld [vmem:[#allocation2 + $0xfa8] sm:$0xff]
    %v575 = vld [vmem:[#allocation2 + $0xfb0] sm:$0xff]
    %v576 = vld [vmem:[#allocation2 + $0xfb8] sm:$0xff]
    %v577 = vld [vmem:[#allocation2 + $0xfc0] sm:$0xff]
    %v578 = vld [vmem:[#allocation2 + $0xfc8] sm:$0xff]
    %v579 = vld [vmem:[#allocation2 + $0xfd0] sm:$0xff]
    %v580 = vld [vmem:[#allocation2 + $0xfd8] sm:$0xff]
    %v581 = vld [vmem:[#allocation2 + $0xfe0] sm:$0xff]
    %v582 = vld [vmem:[#allocation2 + $0xfe8] sm:$0xff]
    %v583 = vld [vmem:[#allocation2 + $0xff0] sm:$0xff]
    %v584 = vld [vmem:[#allocation2 + $0xff8] sm:$0xff]
    %v585 = vld [vmem:[#allocation2 + $0x1000] sm:$0xff]
    %v586 = vld [vmem:[#allocation2 + $0x1008] sm:$0xff]
    %v587 = vld [vmem:[#allocation2 + $0x1010] sm:$0xff]
    %v588 = vld [vmem:[#allocation2 + $0x1018] sm:$0xff]
    %v589 = vld [vmem:[#allocation2 + $0x1020] sm:$0xff]
    %v590 = vld [vmem:[#allocation2 + $0x1028] sm:$0xff]
    %v591 = vld [vmem:[#allocation2 + $0x1030] sm:$0xff]
    %v592 = vld [vmem:[#allocation2 + $0x1038] sm:$0xff]
    %v593 = vld [vmem:[#allocation2 + $0x1040] sm:$0xff]
    %v594 = vld [vmem:[#allocation2 + $0x1048] sm:$0xff]
    %v595 = vld [vmem:[#allocation2 + $0x1050] sm:$0xff]
    %v596 = vld [vmem:[#allocation2 + $0x1058] sm:$0xff]
    %v597 = vld [vmem:[#allocation2 + $0x1060] sm:$0xff]
    %v598 = vld [vmem:[#allocation2 + $0x1068] sm:$0xff]
    %v599 = vld [vmem:[#allocation2 + $0x1070] sm:$0xff]
    %v600 = vld [vmem:[#allocation2 + $0x1078] sm:$0xff]
    %v601 = vld [vmem:[#allocation2 + $0x1080] sm:$0xff]
    %v602 = vld [vmem:[#allocation2 + $0x1088] sm:$0xff]
    %v603 = vld [vmem:[#allocation2 + $0x1090] sm:$0xff]
    %v604 = vld [vmem:[#allocation2 + $0x1098] sm:$0xff]
    %v605 = vld [vmem:[#allocation2 + $0x10a0] sm:$0xff]
    %v606 = vld [vmem:[#allocation2 + $0x10a8] sm:$0xff]
    %v607 = vld [vmem:[#allocation2 + $0x10b0] sm:$0xff]
    %v608 = vld [vmem:[#allocation2 + $0x10b8] sm:$0xff]
    %v609 = vld [vmem:[#allocation2 + $0x10c0] sm:$0xff]
    %v610 = vld [vmem:[#allocation2 + $0x10c8] sm:$0xff]
    %v611 = vld [vmem:[#allocation2 + $0x10d0] sm:$0xff]
    %v612 = vld [vmem:[#allocation2 + $0x10d8] sm:$0xff]
    %v613 = vld [vmem:[#allocation2 + $0x10e0] sm:$0xff]
    %v614 = vld [vmem:[#allocation2 + $0x10e8] sm:$0xff]
    %v615 = vld [vmem:[#allocation2 + $0x10f0] sm:$0xff]
    %v616 = vld [vmem:[#allocation2 + $0x10f8] sm:$0xff]
    %v617 = vld [vmem:[#allocation2 + $0x1100] sm:$0xff]
    %v618 = vld [vmem:[#allocation2 + $0x1108] sm:$0xff]
    %v619 = vld [vmem:[#allocation2 + $0x1110] sm:$0xff]
    %v620 = vld [vmem:[#allocation2 + $0x1118] sm:$0xff]
    %v621 = vld [vmem:[#allocation2 + $0x1120] sm:$0xff]
    %v622 = vld [vmem:[#allocation2 + $0x1128] sm:$0xff]
    %v623 = vld [vmem:[#allocation2 + $0x1130] sm:$0xff]
    %v624 = vld [vmem:[#allocation2 + $0x1138] sm:$0xff]
    %v625 = vld [vmem:[#allocation2 + $0x1140] sm:$0xff]
    %v626 = vld [vmem:[#allocation2 + $0x1148] sm:$0xff]
    %v627 = vld [vmem:[#allocation2 + $0x1150] sm:$0xff]
    %v628 = vld [vmem:[#allocation2 + $0x1158] sm:$0xff]
    %v629 = vld [vmem:[#allocation2 + $0x1160] sm:$0xff]
    %v630 = vld [vmem:[#allocation2 + $0x1168] sm:$0xff]
    %v631 = vld [vmem:[#allocation2 + $0x1170] sm:$0xff]
    %v632 = vld [vmem:[#allocation2 + $0x1178] sm:$0xff]
    %v633 = vld [vmem:[#allocation2 + $0x1180] sm:$0xff]
    %v634 = vld [vmem:[#allocation2 + $0x1188] sm:$0xff]
    %v635 = vld [vmem:[#allocation2 + $0x1190] sm:$0xff]
    %v636 = vld [vmem:[#allocation2 + $0x1198] sm:$0xff]
    %v637 = vld [vmem:[#allocation2 + $0x11a0] sm:$0xff]
    %v638 = vld [vmem:[#allocation2 + $0x11a8] sm:$0xff]
    %v639 = vld [vmem:[#allocation2 + $0x11b0] sm:$0xff]
    %v640 = vld [vmem:[#allocation2 + $0x11b8] sm:$0xff]
    %v641 = vld [vmem:[#allocation2 + $0x11c0] sm:$0xff]
    %v642 = vld [vmem:[#allocation2 + $0x11c8] sm:$0xff]
    %v643 = vld [vmem:[#allocation2 + $0x11d0] sm:$0xff]
    %v644 = vld [vmem:[#allocation2 + $0x11d8] sm:$0xff]
    %v645 = vld [vmem:[#allocation2 + $0x11e0] sm:$0xff]
    %v646 = vld [vmem:[#allocation2 + $0x11e8] sm:$0xff]
    %v647 = vld [vmem:[#allocation2 + $0x11f0] sm:$0xff]
    %v648 = vld [vmem:[#allocation2 + $0x11f8] sm:$0xff]
    %v649 = vld [vmem:[#allocation2 + $0x1200] sm:$0xff]
    %v650 = vld [vmem:[#allocation2 + $0x1208] sm:$0xff]
    %v651 = vld [vmem:[#allocation2 + $0x1210] sm:$0xff]
    %v652 = vld [vmem:[#allocation2 + $0x1218] sm:$0xff]
    %v653 = vld [vmem:[#allocation2 + $0x1220] sm:$0xff]
    %v654 = vld [vmem:[#allocation2 + $0x1228] sm:$0xff]
    %v655 = vld [vmem:[#allocation2 + $0x1230] sm:$0xff]
    %v656 = vld [vmem:[#allocation2 + $0x1238] sm:$0xff]
    %v657 = vld [vmem:[#allocation2 + $0x1240] sm:$0xff]
    %v658 = vld [vmem:[#allocation2 + $0x1248] sm:$0xff]
    %v659 = vld [vmem:[#allocation2 + $0x1250] sm:$0xff]
    %v660 = vld [vmem:[#allocation2 + $0x1258] sm:$0xff]
    %v661 = vld [vmem:[#allocation2 + $0x1260] sm:$0xff]
    %v662 = vld [vmem:[#allocation2 + $0x1268] sm:$0xff]
    %v663 = vld [vmem:[#allocation2 + $0x1270] sm:$0xff]
    %v664 = vld [vmem:[#allocation2 + $0x1278] sm:$0xff]
    %v665 = vld [vmem:[#allocation2 + $0x1280] sm:$0xff]
    %v666 = vld [vmem:[#allocation2 + $0x1288] sm:$0xff]
    %v667 = vld [vmem:[#allocation2 + $0x1290] sm:$0xff]
    %v668 = vld [vmem:[#allocation2 + $0x1298] sm:$0xff]
    %v669 = vld [vmem:[#allocation2 + $0x12a0] sm:$0xff]
    %v670 = vld [vmem:[#allocation2 + $0x12a8] sm:$0xff]
    %v671 = vld [vmem:[#allocation2 + $0x12b0] sm:$0xff]
    %v672 = vld [vmem:[#allocation2 + $0x12b8] sm:$0xff]
    %v673 = vld [vmem:[#allocation2 + $0x12c0] sm:$0xff]
    %v674 = vld [vmem:[#allocation2 + $0x12c8] sm:$0xff]
    %v675 = vld [vmem:[#allocation2 + $0x12d0] sm:$0xff]
    %v676 = vld [vmem:[#allocation2 + $0x12d8] sm:$0xff]
    %v677 = vld [vmem:[#allocation2 + $0x12e0] sm:$0xff]
    %v678 = vld [vmem:[#allocation2 + $0x12e8] sm:$0xff]
    %v679 = vld [vmem:[#allocation2 + $0x12f0] sm:$0xff]
    %v680 = vld [vmem:[#allocation2 + $0x12f8] sm:$0xff]
    %v681 = vld [vmem:[#allocation2 + $0x1300] sm:$0xff]
    %v682 = vld [vmem:[#allocation2 + $0x1308] sm:$0xff]
    %v683 = vld [vmem:[#allocation2 + $0x1310] sm:$0xff]
    %v684 = vld [vmem:[#allocation2 + $0x1318] sm:$0xff]
    %v685 = vld [vmem:[#allocation2 + $0x1320] sm:$0xff]
    %v686 = vld [vmem:[#allocation2 + $0x1328] sm:$0xff]
    %v687 = vld [vmem:[#allocation2 + $0x1330] sm:$0xff]
    %v688 = vld [vmem:[#allocation2 + $0x1338] sm:$0xff]
    %v689 = vld [vmem:[#allocation2 + $0x1340] sm:$0xff]
    %v690 = vld [vmem:[#allocation2 + $0x1348] sm:$0xff]
    %v691 = vld [vmem:[#allocation2 + $0x1350] sm:$0xff]
    %v692 = vld [vmem:[#allocation2 + $0x1358] sm:$0xff]
    %v693 = vld [vmem:[#allocation2 + $0x1360] sm:$0xff]
    %v694 = vld [vmem:[#allocation2 + $0x1368] sm:$0xff]
    %v695 = vld [vmem:[#allocation2 + $0x1370] sm:$0xff]
    %v696 = vld [vmem:[#allocation2 + $0x1378] sm:$0xff]
    %v697 = vld [vmem:[#allocation2 + $0x1380] sm:$0xff]
    %v698 = vld [vmem:[#allocation2 + $0x1388] sm:$0xff]
    %v699 = vld [vmem:[#allocation2 + $0x1390] sm:$0xff]
    %v700 = vld [vmem:[#allocation2 + $0x1398] sm:$0xff]
    %v701 = vld [vmem:[#allocation2 + $0x13a0] sm:$0xff]
    %v702 = vld [vmem:[#allocation2 + $0x13a8] sm:$0xff]
    %v703 = vld [vmem:[#allocation2 + $0x13b0] sm:$0xff]
    %v704 = vld [vmem:[#allocation2 + $0x13b8] sm:$0xff]
    %v705 = vld [vmem:[#allocation2 + $0x13c0] sm:$0xff]
    %v706 = vld [vmem:[#allocation2 + $0x13c8] sm:$0xff]
    %v707 = vld [vmem:[#allocation2 + $0x13d0] sm:$0xff]
    %v708 = vld [vmem:[#allocation2 + $0x13d8] sm:$0xff]
    %v709 = vld [vmem:[#allocation2 + $0x13e0] sm:$0xff]
    %v710 = vld [vmem:[#allocation2 + $0x13e8] sm:$0xff]
    %v711 = vld [vmem:[#allocation2 + $0x13f0] sm:$0xff]
    %v712 = vld [vmem:[#allocation2 + $0x13f8] sm:$0xff]
    %v713 = vld [vmem:[#allocation2 + $0x1400] sm:$0xff]
    %v714 = vld [vmem:[#allocation2 + $0x1408] sm:$0xff]
    %v715 = vld [vmem:[#allocation2 + $0x1410] sm:$0xff]
    %v716 = vld [vmem:[#allocation2 + $0x1418] sm:$0xff]
    %v717 = vld [vmem:[#allocation2 + $0x1420] sm:$0xff]
    %v718 = vld [vmem:[#allocation2 + $0x1428] sm:$0xff]
    %v719 = vld [vmem:[#allocation2 + $0x1430] sm:$0xff]
    %v720 = vld [vmem:[#allocation2 + $0x1438] sm:$0xff]
    %v721 = vld [vmem:[#allocation2 + $0x1440] sm:$0xff]
    %v722 = vld [vmem:[#allocation2 + $0x1448] sm:$0xff]
    %v723 = vld [vmem:[#allocation2 + $0x1450] sm:$0xff]
    %v724 = vld [vmem:[#allocation2 + $0x1458] sm:$0xff]
    %v725 = vld [vmem:[#allocation2 + $0x1460] sm:$0xff]
    %v726 = vld [vmem:[#allocation2 + $0x1468] sm:$0xff]
    %v727 = vld [vmem:[#allocation2 + $0x1470] sm:$0xff]
    %v728 = vld [vmem:[#allocation2 + $0x1478] sm:$0xff]
    %v729 = vld [vmem:[#allocation2 + $0x1480] sm:$0xff]
    %v730 = vld [vmem:[#allocation2 + $0x1488] sm:$0xff]
    %v731 = vld [vmem:[#allocation2 + $0x1490] sm:$0xff]
    %v732 = vld [vmem:[#allocation2 + $0x1498] sm:$0xff]
    %v733 = vld [vmem:[#allocation2 + $0x14a0] sm:$0xff]
    %v734 = vld [vmem:[#allocation2 + $0x14a8] sm:$0xff]
    %v735 = vld [vmem:[#allocation2 + $0x14b0] sm:$0xff]
    %v736 = vld [vmem:[#allocation2 + $0x14b8] sm:$0xff]
    %v737 = vld [vmem:[#allocation2 + $0x14c0] sm:$0xff]
    %v738 = vld [vmem:[#allocation2 + $0x14c8] sm:$0xff]
    %v739 = vld [vmem:[#allocation2 + $0x14d0] sm:$0xff]
    %v740 = vld [vmem:[#allocation2 + $0x14d8] sm:$0xff]
    %v741 = vld [vmem:[#allocation2 + $0x14e0] sm:$0xff]
    %v742 = vld [vmem:[#allocation2 + $0x14e8] sm:$0xff]
    %v743 = vld [vmem:[#allocation2 + $0x14f0] sm:$0xff]
    %v744 = vld [vmem:[#allocation2 + $0x14f8] sm:$0xff]
    %v745 = vld [vmem:[#allocation2 + $0x1500] sm:$0xff]
    %v746 = vld [vmem:[#allocation2 + $0x1508] sm:$0xff]
    %v747 = vld [vmem:[#allocation2 + $0x1510] sm:$0xff]
    %v748 = vld [vmem:[#allocation2 + $0x1518] sm:$0xff]
    %v749 = vld [vmem:[#allocation2 + $0x1520] sm:$0xff]
    %v750 = vld [vmem:[#allocation2 + $0x1528] sm:$0xff]
    %v751 = vld [vmem:[#allocation2 + $0x1530] sm:$0xff]
    %v752 = vld [vmem:[#allocation2 + $0x1538] sm:$0xff]
    %v753 = vld [vmem:[#allocation2 + $0x1540] sm:$0xff]
    %v754 = vld [vmem:[#allocation2 + $0x1548] sm:$0xff]
    %v755 = vld [vmem:[#allocation2 + $0x1550] sm:$0xff]
    %v756 = vld [vmem:[#allocation2 + $0x1558] sm:$0xff]
    %v757 = vld [vmem:[#allocation2 + $0x1560] sm:$0xff]
    %v758 = vld [vmem:[#allocation2 + $0x1568] sm:$0xff]
    %v759 = vld [vmem:[#allocation2 + $0x1570] sm:$0xff]
    %v760 = vld [vmem:[#allocation2 + $0x1578] sm:$0xff]
    %v761 = vld [vmem:[#allocation2 + $0x1580] sm:$0xff]
    %v762 = vld [vmem:[#allocation2 + $0x1588] sm:$0xff]
    %v763 = vld [vmem:[#allocation2 + $0x1590] sm:$0xff]
    %v764 = vld [vmem:[#allocation2 + $0x1598] sm:$0xff]
    %v765 = vld [vmem:[#allocation2 + $0x15a0] sm:$0xff]
    %v766 = vld [vmem:[#allocation2 + $0x15a8] sm:$0xff]
    %v767 = vld [vmem:[#allocation2 + $0x15b0] sm:$0xff]
    %v768 = vld [vmem:[#allocation2 + $0x15b8] sm:$0xff]
    %v769 = vld [vmem:[#allocation2 + $0x15c0] sm:$0xff]
    %v770 = vld [vmem:[#allocation2 + $0x15c8] sm:$0xff]
    %v771 = vld [vmem:[#allocation2 + $0x15d0] sm:$0xff]
    %v772 = vld [vmem:[#allocation2 + $0x15d8] sm:$0xff]
    %v773 = vld [vmem:[#allocation2 + $0x15e0] sm:$0xff]
    %v774 = vld [vmem:[#allocation2 + $0x15e8] sm:$0xff]
    %v775 = vld [vmem:[#allocation2 + $0x15f0] sm:$0xff]
    %v776 = vld [vmem:[#allocation2 + $0x15f8] sm:$0xff]
    %v777 = vld [vmem:[#allocation2 + $0x1600] sm:$0xff]
    %v778 = vld [vmem:[#allocation2 + $0x1608] sm:$0xff]
    %v779 = vld [vmem:[#allocation2 + $0x1610] sm:$0xff]
    %v780 = vld [vmem:[#allocation2 + $0x1618] sm:$0xff]
    %v781 = vld [vmem:[#allocation2 + $0x1620] sm:$0xff]
    %v782 = vld [vmem:[#allocation2 + $0x1628] sm:$0xff]
    %v783 = vld [vmem:[#allocation2 + $0x1630] sm:$0xff]
    %v784 = vld [vmem:[#allocation2 + $0x1638] sm:$0xff]
    %v785 = vld [vmem:[#allocation2 + $0x1640] sm:$0xff]
    %v786 = vld [vmem:[#allocation2 + $0x1648] sm:$0xff]
    %v787 = vld [vmem:[#allocation2 + $0x1650] sm:$0xff]
    %v788 = vld [vmem:[#allocation2 + $0x1658] sm:$0xff]
    %v789 = vld [vmem:[#allocation2 + $0x1660] sm:$0xff]
    %v790 = vld [vmem:[#allocation2 + $0x1668] sm:$0xff]
    %v791 = vld [vmem:[#allocation2 + $0x1670] sm:$0xff]
    %v792 = vld [vmem:[#allocation2 + $0x1678] sm:$0xff]
    %v793 = vld [vmem:[#allocation2 + $0x1680] sm:$0xff]
    %v794 = vld [vmem:[#allocation2 + $0x1688] sm:$0xff]
    %v795 = vld [vmem:[#allocation2 + $0x1690] sm:$0xff]
    %v796 = vld [vmem:[#allocation2 + $0x1698] sm:$0xff]
    %v797 = vld [vmem:[#allocation2 + $0x16a0] sm:$0xff]
    %v798 = vld [vmem:[#allocation2 + $0x16a8] sm:$0xff]
    %v799 = vld [vmem:[#allocation2 + $0x16b0] sm:$0xff]
    %v800 = vld [vmem:[#allocation2 + $0x16b8] sm:$0xff]
    %v801 = vld [vmem:[#allocation2 + $0x16c0] sm:$0xff]
    %v802 = vld [vmem:[#allocation2 + $0x16c8] sm:$0xff]
    %v803 = vld [vmem:[#allocation2 + $0x16d0] sm:$0xff]
    %v804 = vld [vmem:[#allocation2 + $0x16d8] sm:$0xff]
    %v805 = vld [vmem:[#allocation2 + $0x16e0] sm:$0xff]
    %v806 = vld [vmem:[#allocation2 + $0x16e8] sm:$0xff]
    %v807 = vld [vmem:[#allocation2 + $0x16f0] sm:$0xff]
    %v808 = vld [vmem:[#allocation2 + $0x16f8] sm:$0xff]
    %v809 = vld [vmem:[#allocation2 + $0x1700] sm:$0xff]
    %v810 = vld [vmem:[#allocation2 + $0x1708] sm:$0xff]
    %v811 = vld [vmem:[#allocation2 + $0x1710] sm:$0xff]
    %v812 = vld [vmem:[#allocation2 + $0x1718] sm:$0xff]
    %v813 = vld [vmem:[#allocation2 + $0x1720] sm:$0xff]
    %v814 = vld [vmem:[#allocation2 + $0x1728] sm:$0xff]
    %v815 = vld [vmem:[#allocation2 + $0x1730] sm:$0xff]
    %v816 = vld [vmem:[#allocation2 + $0x1738] sm:$0xff]
    %v817 = vld [vmem:[#allocation2 + $0x1740] sm:$0xff]
    %v818 = vld [vmem:[#allocation2 + $0x1748] sm:$0xff]
    %v819 = vld [vmem:[#allocation2 + $0x1750] sm:$0xff]
    %v820 = vld [vmem:[#allocation2 + $0x1758] sm:$0xff]
    %v821 = vld [vmem:[#allocation2 + $0x1760] sm:$0xff]
    %v822 = vld [vmem:[#allocation2 + $0x1768] sm:$0xff]
    %v823 = vld [vmem:[#allocation2 + $0x1770] sm:$0xff]
    %v824 = vld [vmem:[#allocation2 + $0x1778] sm:$0xff]
    %v825 = vld [vmem:[#allocation2 + $0x1780] sm:$0xff]
    %v826 = vld [vmem:[#allocation2 + $0x1788] sm:$0xff]
    %v827 = vld [vmem:[#allocation2 + $0x1790] sm:$0xff]
    %v828 = vld [vmem:[#allocation2 + $0x1798] sm:$0xff]
    %v829 = vld [vmem:[#allocation2 + $0x17a0] sm:$0xff]
    %v830 = vld [vmem:[#allocation2 + $0x17a8] sm:$0xff]
    %v831 = vld [vmem:[#allocation2 + $0x17b0] sm:$0xff]
    %v832 = vld [vmem:[#allocation2 + $0x17b8] sm:$0xff]
    %v833 = vld [vmem:[#allocation2 + $0x17c0] sm:$0xff]
    %v834 = vld [vmem:[#allocation2 + $0x17c8] sm:$0xff]
    %v835 = vld [vmem:[#allocation2 + $0x17d0] sm:$0xff]
    %v836 = vld [vmem:[#allocation2 + $0x17d8] sm:$0xff]
    %v837 = vld [vmem:[#allocation2 + $0x17e0] sm:$0xff]
    %v838 = vld [vmem:[#allocation2 + $0x17e8] sm:$0xff]
    %v839 = vld [vmem:[#allocation2 + $0x17f0] sm:$0xff]
    %v840 = vld [vmem:[#allocation2 + $0x17f8] sm:$0xff]
    %v841 = vld [vmem:[#allocation2 + $0x1800] sm:$0xff]
    %v842 = vld [vmem:[#allocation2 + $0x1808] sm:$0xff]
    %v843 = vld [vmem:[#allocation2 + $0x1810] sm:$0xff]
    %v844 = vld [vmem:[#allocation2 + $0x1818] sm:$0xff]
    %v845 = vld [vmem:[#allocation2 + $0x1820] sm:$0xff]
    %v846 = vld [vmem:[#allocation2 + $0x1828] sm:$0xff]
    %v847 = vld [vmem:[#allocation2 + $0x1830] sm:$0xff]
    %v848 = vld [vmem:[#allocation2 + $0x1838] sm:$0xff]
    %v849 = vld [vmem:[#allocation2 + $0x1840] sm:$0xff]
    %v850 = vld [vmem:[#allocation2 + $0x1848] sm:$0xff]
    %v851 = vld [vmem:[#allocation2 + $0x1850] sm:$0xff]
    %v852 = vld [vmem:[#allocation2 + $0x1858] sm:$0xff]
    %v853 = vld [vmem:[#allocation2 + $0x1860] sm:$0xff]
    %v854 = vld [vmem:[#allocation2 + $0x1868] sm:$0xff]
    %v855 = vld [vmem:[#allocation2 + $0x1870] sm:$0xff]
    %v856 = vld [vmem:[#allocation2 + $0x1878] sm:$0xff]
    %v857 = vld [vmem:[#allocation2 + $0x1880] sm:$0xff]
    %v858 = vld [vmem:[#allocation2 + $0x1888] sm:$0xff]
    %v859 = vld [vmem:[#allocation2 + $0x1890] sm:$0xff]
    %v860 = vld [vmem:[#allocation2 + $0x1898] sm:$0xff]
    %v861 = vld [vmem:[#allocation2 + $0x18a0] sm:$0xff]
    %v862 = vld [vmem:[#allocation2 + $0x18a8] sm:$0xff]
    %v863 = vld [vmem:[#allocation2 + $0x18b0] sm:$0xff]
    %v864 = vld [vmem:[#allocation2 + $0x18b8] sm:$0xff]
    %v865 = vld [vmem:[#allocation2 + $0x18c0] sm:$0xff]
    %v866 = vld [vmem:[#allocation2 + $0x18c8] sm:$0xff]
    %v867 = vld [vmem:[#allocation2 + $0x18d0] sm:$0xff]
    %v868 = vld [vmem:[#allocation2 + $0x18d8] sm:$0xff]
    %v869 = vld [vmem:[#allocation2 + $0x18e0] sm:$0xff]
    %v870 = vld [vmem:[#allocation2 + $0x18e8] sm:$0xff]
    %v871 = vld [vmem:[#allocation2 + $0x18f0] sm:$0xff]
    %v872 = vld [vmem:[#allocation2 + $0x18f8] sm:$0xff]
    %v873 = vld [vmem:[#allocation2 + $0x1900] sm:$0xff]
    %v874 = vld [vmem:[#allocation2 + $0x1908] sm:$0xff]
    %v875 = vld [vmem:[#allocation2 + $0x1910] sm:$0xff]
    %v876 = vld [vmem:[#allocation2 + $0x1918] sm:$0xff]
    %v877 = vld [vmem:[#allocation2 + $0x1920] sm:$0xff]
    %v878 = vld [vmem:[#allocation2 + $0x1928] sm:$0xff]
    %v879 = vld [vmem:[#allocation2 + $0x1930] sm:$0xff]
    %v880 = vld [vmem:[#allocation2 + $0x1938] sm:$0xff]
    %v881 = vld [vmem:[#allocation2 + $0x1940] sm:$0xff]
    %v882 = vld [vmem:[#allocation2 + $0x1948] sm:$0xff]
    %v883 = vld [vmem:[#allocation2 + $0x1950] sm:$0xff]
    %v884 = vld [vmem:[#allocation2 + $0x1958] sm:$0xff]
    %v885 = vld [vmem:[#allocation2 + $0x1960] sm:$0xff]
    %v886 = vld [vmem:[#allocation2 + $0x1968] sm:$0xff]
    %v887 = vld [vmem:[#allocation2 + $0x1970] sm:$0xff]
    %v888 = vld [vmem:[#allocation2 + $0x1978] sm:$0xff]
    %v889 = vld [vmem:[#allocation2 + $0x1980] sm:$0xff]
    %v890 = vld [vmem:[#allocation2 + $0x1988] sm:$0xff]
    %v891 = vld [vmem:[#allocation2 + $0x1990] sm:$0xff]
    %v892 = vld [vmem:[#allocation2 + $0x1998] sm:$0xff]
    %v893 = vld [vmem:[#allocation2 + $0x19a0] sm:$0xff]
    %v894 = vld [vmem:[#allocation2 + $0x19a8] sm:$0xff]
    %v895 = vld [vmem:[#allocation2 + $0x19b0] sm:$0xff]
    %v896 = vld [vmem:[#allocation2 + $0x19b8] sm:$0xff]
    %v897 = vld [vmem:[#allocation2 + $0x19c0] sm:$0xff]
    %v898 = vld [vmem:[#allocation2 + $0x19c8] sm:$0xff]
    %v899 = vld [vmem:[#allocation2 + $0x19d0] sm:$0xff]
    %v900 = vld [vmem:[#allocation2 + $0x19d8] sm:$0xff]
    %v901 = vld [vmem:[#allocation2 + $0x19e0] sm:$0xff]
    %v902 = vld [vmem:[#allocation2 + $0x19e8] sm:$0xff]
    %v903 = vld [vmem:[#allocation2 + $0x19f0] sm:$0xff]
    %v904 = vld [vmem:[#allocation2 + $0x19f8] sm:$0xff]
    %v905 = vld [vmem:[#allocation2 + $0x1a00] sm:$0xff]
    %v906 = vld [vmem:[#allocation2 + $0x1a08] sm:$0xff]
    %v907 = vld [vmem:[#allocation2 + $0x1a10] sm:$0xff]
    %v908 = vld [vmem:[#allocation2 + $0x1a18] sm:$0xff]
    %v909 = vld [vmem:[#allocation2 + $0x1a20] sm:$0xff]
    %v910 = vld [vmem:[#allocation2 + $0x1a28] sm:$0xff]
    %v911 = vld [vmem:[#allocation2 + $0x1a30] sm:$0xff]
    %v912 = vld [vmem:[#allocation2 + $0x1a38] sm:$0xff]
    %v913 = vld [vmem:[#allocation2 + $0x1a40] sm:$0xff]
    %v914 = vld [vmem:[#allocation2 + $0x1a48] sm:$0xff]
    %v915 = vld [vmem:[#allocation2 + $0x1a50] sm:$0xff]
    %v916 = vld [vmem:[#allocation2 + $0x1a58] sm:$0xff]
    %v917 = vld [vmem:[#allocation2 + $0x1a60] sm:$0xff]
    %v918 = vld [vmem:[#allocation2 + $0x1a68] sm:$0xff]
    %v919 = vld [vmem:[#allocation2 + $0x1a70] sm:$0xff]
    %v920 = vld [vmem:[#allocation2 + $0x1a78] sm:$0xff]
    %v921 = vld [vmem:[#allocation2 + $0x1a80] sm:$0xff]
    %v922 = vld [vmem:[#allocation2 + $0x1a88] sm:$0xff]
    %v923 = vld [vmem:[#allocation2 + $0x1a90] sm:$0xff]
    %v924 = vld [vmem:[#allocation2 + $0x1a98] sm:$0xff]
    %v925 = vld [vmem:[#allocation2 + $0x1aa0] sm:$0xff]
    %v926 = vld [vmem:[#allocation2 + $0x1aa8] sm:$0xff]
    %v927 = vld [vmem:[#allocation2 + $0x1ab0] sm:$0xff]
    %v928 = vld [vmem:[#allocation2 + $0x1ab8] sm:$0xff]
    %v929 = vld [vmem:[#allocation2 + $0x1ac0] sm:$0xff]
    %v930 = vld [vmem:[#allocation2 + $0x1ac8] sm:$0xff]
    %v931 = vld [vmem:[#allocation2 + $0x1ad0] sm:$0xff]
    %v932 = vld [vmem:[#allocation2 + $0x1ad8] sm:$0xff]
    %v933 = vld [vmem:[#allocation2 + $0x1ae0] sm:$0xff]
    %v934 = vld [vmem:[#allocation2 + $0x1ae8] sm:$0xff]
    %v935 = vld [vmem:[#allocation2 + $0x1af0] sm:$0xff]
    %v936 = vld [vmem:[#allocation2 + $0x1af8] sm:$0xff]
    %v937 = vld [vmem:[#allocation2 + $0x1b00] sm:$0xff]
    %v938 = vld [vmem:[#allocation2 + $0x1b08] sm:$0xff]
    %v939 = vld [vmem:[#allocation2 + $0x1b10] sm:$0xff]
    %v940 = vld [vmem:[#allocation2 + $0x1b18] sm:$0xff]
    %v941 = vld [vmem:[#allocation2 + $0x1b20] sm:$0xff]
    %v942 = vld [vmem:[#allocation2 + $0x1b28] sm:$0xff]
    %v943 = vld [vmem:[#allocation2 + $0x1b30] sm:$0xff]
    %v944 = vld [vmem:[#allocation2 + $0x1b38] sm:$0xff]
    %v945 = vld [vmem:[#allocation2 + $0x1b40] sm:$0xff]
    %v946 = vld [vmem:[#allocation2 + $0x1b48] sm:$0xff]
    %v947 = vld [vmem:[#allocation2 + $0x1b50] sm:$0xff]
    %v948 = vld [vmem:[#allocation2 + $0x1b58] sm:$0xff]
    %v949 = vld [vmem:[#allocation2 + $0x1b60] sm:$0xff]
    %v950 = vld [vmem:[#allocation2 + $0x1b68] sm:$0xff]
    %v951 = vld [vmem:[#allocation2 + $0x1b70] sm:$0xff]
    %v952 = vld [vmem:[#allocation2 + $0x1b78] sm:$0xff]
    %v953 = vld [vmem:[#allocation2 + $0x1b80] sm:$0xff]
    %v954 = vld [vmem:[#allocation2 + $0x1b88] sm:$0xff]
    %v955 = vld [vmem:[#allocation2 + $0x1b90] sm:$0xff]
    %v956 = vld [vmem:[#allocation2 + $0x1b98] sm:$0xff]
    %v957 = vld [vmem:[#allocation2 + $0x1ba0] sm:$0xff]
    %v958 = vld [vmem:[#allocation2 + $0x1ba8] sm:$0xff]
    %v959 = vld [vmem:[#allocation2 + $0x1bb0] sm:$0xff]
    %v960 = vld [vmem:[#allocation2 + $0x1bb8] sm:$0xff]
    %v961 = vld [vmem:[#allocation2 + $0x1bc0] sm:$0xff]
    %v962 = vld [vmem:[#allocation2 + $0x1bc8] sm:$0xff]
    %v963 = vld [vmem:[#allocation2 + $0x1bd0] sm:$0xff]
    %v964 = vld [vmem:[#allocation2 + $0x1bd8] sm:$0xff]
    %v965 = vld [vmem:[#allocation2 + $0x1be0] sm:$0xff]
    %v966 = vld [vmem:[#allocation2 + $0x1be8] sm:$0xff]
    %v967 = vld [vmem:[#allocation2 + $0x1bf0] sm:$0xff]
    %v968 = vld [vmem:[#allocation2 + $0x1bf8] sm:$0xff]
    %969 = vmatprep.subr.mxu0 %v74
    %970 = vmatpush1.msra.mxu0 %v73
    %971 = vmatprep.subr.mxu0 %v78
    %972 = vmatpush1.msra.mxu0 %v77
    %973 = vmatprep.subr.mxu0 %v82
    %974 = vmatpush1.msra.mxu0 %v81
    %975 = vmatprep.subr.mxu0 %v86
    %976 = vmatpush1.msra.mxu0 %v85
    %977 = vmatprep.subr.mxu0 %v90
    %978 = vmatpush1.msra.mxu0 %v89
    %979 = vmatprep.subr.mxu0 %v94
    %980 = vmatpush1.msra.mxu0 %v93
    %981 = vmatprep.subr.mxu0 %v98
    %982 = vmatpush1.msra.mxu0 %v97
    %983 = vmatprep.subr.mxu0 %v102
    %984 = vmatpush1.msra.mxu0 %v101
    %985 = vmatprep.subr.mxu0 %v106
    %986 = vmatpush1.msra.mxu0 %v105
    %987 = vmatprep.subr.mxu0 %v110
    %988 = vmatpush1.msra.mxu0 %v109
    %989 = vmatprep.subr.mxu0 %v114
    %990 = vmatpush1.msra.mxu0 %v113
    %991 = vmatprep.subr.mxu0 %v118
    %992 = vmatpush1.msra.mxu0 %v117
    %993 = vmatprep.subr.mxu0 %v122
    %994 = vmatpush1.msra.mxu0 %v121
    %995 = vmatprep.subr.mxu0 %v126
    %996 = vmatpush1.msra.mxu0 %v125
    %997 = vmatprep.subr.mxu0 %v130
    %998 = vmatpush1.msra.mxu0 %v129
    %999 = vmatprep.subr.mxu0 %v134
    %1000 = vmatpush1.msra.mxu0 %v133
    %1001 = vmatprep.subr.mxu0 %v138
    %1002 = vmatpush1.msra.mxu0 %v137
    %1003 = vmatprep.subr.mxu0 %v142
    %1004 = vmatpush1.msra.mxu0 %v141
    %1005 = vmatprep.subr.mxu0 %v146
    %1006 = vmatpush1.msra.mxu0 %v145
    %1007 = vmatprep.subr.mxu0 %v150
    %1008 = vmatpush1.msra.mxu0 %v149
    %1009 = vmatprep.subr.mxu0 %v154
    %1010 = vmatpush1.msra.mxu0 %v153
    %1011 = vmatprep.subr.mxu0 %v158
    %1012 = vmatpush1.msra.mxu0 %v157
    %1013 = vmatprep.subr.mxu0 %v162
    %1014 = vmatpush1.msra.mxu0 %v161
    %1015 = vmatprep.subr.mxu0 %v166
    %1016 = vmatpush1.msra.mxu0 %v165
    %1017 = vmatprep.subr.mxu0 %v170
    %1018 = vmatpush1.msra.mxu0 %v169
    %1019 = vmatprep.subr.mxu0 %v174
    %1020 = vmatpush1.msra.mxu0 %v173
    %1021 = vmatprep.subr.mxu0 %v178
    %1022 = vmatpush1.msra.mxu0 %v177
    %1023 = vmatprep.subr.mxu0 %v182
    %1024 = vmatpush1.msra.mxu0 %v181
    %1025 = vmatprep.subr.mxu0 %v186
    %1026 = vmatpush1.msra.mxu0 %v185
    %1027 = vmatprep.subr.mxu0 %v190
    %1028 = vmatpush1.msra.mxu0 %v189
    %1029 = vmatprep.subr.mxu0 %v194
    %1030 = vmatpush1.msra.mxu0 %v193
    %1031 = vmatprep.subr.mxu0 %v198
    %1032 = vmatpush1.msra.mxu0 %v197
    %1033 = vmatprep.mubr.f32.mxu0 %v60
    %1034 = vmatmul.mubr.f32.gmra.mrb[0].mxu0 %v59
    %v1035 = vpop.f32.mrb[0].mxu0
    %v1036 = vadd.f32 0.0, %v1035
    %v1037 = vpop.f32.mrb[0].mxu0
    %v1038 = vadd.f32 0.0, %v1037
    %1039 = vdwg.mxu0
    %1040 = vmatprep.subr.mxu0 %v202
    %1041 = vmatpush1.msra.mxu0 %v201
    %1042 = vmatprep.subr.mxu0 %v206
    %1043 = vmatpush1.msra.mxu0 %v205
    %1044 = vmatprep.subr.mxu0 %v210
    %1045 = vmatpush1.msra.mxu0 %v209
    %1046 = vmatprep.subr.mxu0 %v214
    %1047 = vmatpush1.msra.mxu0 %v213
    %1048 = vmatprep.subr.mxu0 %v218
    %1049 = vmatpush1.msra.mxu0 %v217
    %1050 = vmatprep.subr.mxu0 %v222
    %1051 = vmatpush1.msra.mxu0 %v221
    %1052 = vmatprep.subr.mxu0 %v226
    %1053 = vmatpush1.msra.mxu0 %v225
    %1054 = vmatprep.subr.mxu0 %v230
    %1055 = vmatpush1.msra.mxu0 %v229
    %1056 = vmatprep.subr.mxu0 %v234
    %1057 = vmatpush1.msra.mxu0 %v233
    %1058 = vmatprep.subr.mxu0 %v238
    %1059 = vmatpush1.msra.mxu0 %v237
    %1060 = vmatprep.subr.mxu0 %v242
    %1061 = vmatpush1.msra.mxu0 %v241
    %1062 = vmatprep.subr.mxu0 %v246
    %1063 = vmatpush1.msra.mxu0 %v245
    %1064 = vmatprep.subr.mxu0 %v250
    %1065 = vmatpush1.msra.mxu0 %v249
    %1066 = vmatprep.subr.mxu0 %v254
    %1067 = vmatpush1.msra.mxu0 %v253
    %1068 = vmatprep.subr.mxu0 %v258
    %1069 = vmatpush1.msra.mxu0 %v257
    %1070 = vmatprep.subr.mxu0 %v262
    %1071 = vmatpush1.msra.mxu0 %v261
    %1072 = vmatprep.subr.mxu0 %v266
    %1073 = vmatpush1.msra.mxu0 %v265
    %1074 = vmatprep.subr.mxu0 %v270
    %1075 = vmatpush1.msra.mxu0 %v269
    %1076 = vmatprep.subr.mxu0 %v274
    %1077 = vmatpush1.msra.mxu0 %v273
    %1078 = vmatprep.subr.mxu0 %v278
    %1079 = vmatpush1.msra.mxu0 %v277
    %1080 = vmatprep.subr.mxu0 %v282
    %1081 = vmatpush1.msra.mxu0 %v281
    %1082 = vmatprep.subr.mxu0 %v286
    %1083 = vmatpush1.msra.mxu0 %v285
    %1084 = vmatprep.subr.mxu0 %v290
    %1085 = vmatpush1.msra.mxu0 %v289
    %1086 = vmatprep.subr.mxu0 %v294
    %1087 = vmatpush1.msra.mxu0 %v293
    %1088 = vmatprep.subr.mxu0 %v298
    %1089 = vmatpush1.msra.mxu0 %v297
    %1090 = vmatprep.subr.mxu0 %v302
    %1091 = vmatpush1.msra.mxu0 %v301
    %1092 = vmatprep.subr.mxu0 %v306
    %1093 = vmatpush1.msra.mxu0 %v305
    %1094 = vmatprep.subr.mxu0 %v310
    %1095 = vmatpush1.msra.mxu0 %v309
    %1096 = vmatprep.subr.mxu0 %v314
    %1097 = vmatpush1.msra.mxu0 %v313
    %1098 = vmatprep.subr.mxu0 %v318
    %1099 = vmatpush1.msra.mxu0 %v317
    %1100 = vmatprep.subr.mxu0 %v322
    %1101 = vmatpush1.msra.mxu0 %v321
    %1102 = vmatprep.subr.mxu0 %v326
    %1103 = vmatpush1.msra.mxu0 %v325
    %1104 = vmatprep.mubr.f32.mxu0 %v62
    %1105 = vmatmul.mubr.f32.gmra.mrb[0].mxu0 %v61
    %v1106 = vpop.f32.mrb[0].mxu0
    %v1107 = vadd.f32 %v1036, %v1106
    %v1108 = vpop.f32.mrb[0].mxu0
    %v1109 = vadd.f32 %v1038, %v1108
    %1110 = vdwg.mxu0
    %1111 = vmatprep.subr.mxu0 %v330
    %1112 = vmatpush1.msra.mxu0 %v329
    %1113 = vmatprep.subr.mxu0 %v334
    %1114 = vmatpush1.msra.mxu0 %v333
    %1115 = vmatprep.subr.mxu0 %v338
    %1116 = vmatpush1.msra.mxu0 %v337
    %1117 = vmatprep.subr.mxu0 %v342
    %1118 = vmatpush1.msra.mxu0 %v341
    %1119 = vmatprep.subr.mxu0 %v346
    %1120 = vmatpush1.msra.mxu0 %v345
    %1121 = vmatprep.subr.mxu0 %v350
    %1122 = vmatpush1.msra.mxu0 %v349
    %1123 = vmatprep.subr.mxu0 %v354
    %1124 = vmatpush1.msra.mxu0 %v353
    %1125 = vmatprep.subr.mxu0 %v358
    %1126 = vmatpush1.msra.mxu0 %v357
    %1127 = vmatprep.subr.mxu0 %v362
    %1128 = vmatpush1.msra.mxu0 %v361
    %1129 = vmatprep.subr.mxu0 %v366
    %1130 = vmatpush1.msra.mxu0 %v365
    %1131 = vmatprep.subr.mxu0 %v370
    %1132 = vmatpush1.msra.mxu0 %v369
    %1133 = vmatprep.subr.mxu0 %v374
    %1134 = vmatpush1.msra.mxu0 %v373
    %1135 = vmatprep.subr.mxu0 %v378
    %1136 = vmatpush1.msra.mxu0 %v377
    %1137 = vmatprep.subr.mxu0 %v382
    %1138 = vmatpush1.msra.mxu0 %v381
    %1139 = vmatprep.subr.mxu0 %v386
    %1140 = vmatpush1.msra.mxu0 %v385
    %1141 = vmatprep.subr.mxu0 %v390
    %1142 = vmatpush1.msra.mxu0 %v389
    %1143 = vmatprep.subr.mxu0 %v394
    %1144 = vmatpush1.msra.mxu0 %v393
    %1145 = vmatprep.subr.mxu0 %v398
    %1146 = vmatpush1.msra.mxu0 %v397
    %1147 = vmatprep.subr.mxu0 %v402
    %1148 = vmatpush1.msra.mxu0 %v401
    %1149 = vmatprep.subr.mxu0 %v406
    %1150 = vmatpush1.msra.mxu0 %v405
    %1151 = vmatprep.subr.mxu0 %v410
    %1152 = vmatpush1.msra.mxu0 %v409
    %1153 = vmatprep.subr.mxu0 %v414
    %1154 = vmatpush1.msra.mxu0 %v413
    %1155 = vmatprep.subr.mxu0 %v418
    %1156 = vmatpush1.msra.mxu0 %v417
    %1157 = vmatprep.subr.mxu0 %v422
    %1158 = vmatpush1.msra.mxu0 %v421
    %1159 = vmatprep.subr.mxu0 %v426
    %1160 = vmatpush1.msra.mxu0 %v425
    %1161 = vmatprep.subr.mxu0 %v430
    %1162 = vmatpush1.msra.mxu0 %v429
    %1163 = vmatprep.subr.mxu0 %v434
    %1164 = vmatpush1.msra.mxu0 %v433
    %1165 = vmatprep.subr.mxu0 %v438
    %1166 = vmatpush1.msra.mxu0 %v437
    %1167 = vmatprep.subr.mxu0 %v442
    %1168 = vmatpush1.msra.mxu0 %v441
    %1169 = vmatprep.subr.mxu0 %v446
    %1170 = vmatpush1.msra.mxu0 %v445
    %1171 = vmatprep.subr.mxu0 %v450
    %1172 = vmatpush1.msra.mxu0 %v449
    %1173 = vmatprep.subr.mxu0 %v454
    %1174 = vmatpush1.msra.mxu0 %v453
    %1175 = vmatprep.mubr.f32.mxu0 %v64
    %1176 = vmatmul.mubr.f32.gmra.mrb[0].mxu0 %v63
    %v1177 = vpop.f32.mrb[0].mxu0
    %v1178 = vadd.f32 %v1107, %v1177
    %v1179 = vpop.f32.mrb[0].mxu0
    %v1180 = vadd.f32 %v1109, %v1179
    %1181 = vdwg.mxu0
    %1182 = vmatprep.subr.mxu0 %v458
    %1183 = vmatpush1.msra.mxu0 %v457
    %1184 = vmatprep.subr.mxu0 %v462
    %1185 = vmatpush1.msra.mxu0 %v461
    %1186 = vmatprep.subr.mxu0 %v466
    %1187 = vmatpush1.msra.mxu0 %v465
    %1188 = vmatprep.subr.mxu0 %v470
    %1189 = vmatpush1.msra.mxu0 %v469
    %1190 = vmatprep.subr.mxu0 %v474
    %1191 = vmatpush1.msra.mxu0 %v473
    %1192 = vmatprep.subr.mxu0 %v478
    %1193 = vmatpush1.msra.mxu0 %v477
    %1194 = vmatprep.subr.mxu0 %v482
    %1195 = vmatpush1.msra.mxu0 %v481
    %1196 = vmatprep.subr.mxu0 %v486
    %1197 = vmatpush1.msra.mxu0 %v485
    %1198 = vmatprep.subr.mxu0 %v490
    %1199 = vmatpush1.msra.mxu0 %v489
    %1200 = vmatprep.subr.mxu0 %v494
    %1201 = vmatpush1.msra.mxu0 %v493
    %1202 = vmatprep.subr.mxu0 %v498
    %1203 = vmatpush1.msra.mxu0 %v497
    %1204 = vmatprep.subr.mxu0 %v502
    %1205 = vmatpush1.msra.mxu0 %v501
    %1206 = vmatprep.subr.mxu0 %v506
    %1207 = vmatpush1.msra.mxu0 %v505
    %1208 = vmatprep.subr.mxu0 %v510
    %1209 = vmatpush1.msra.mxu0 %v509
    %1210 = vmatprep.subr.mxu0 %v514
    %1211 = vmatpush1.msra.mxu0 %v513
    %1212 = vmatprep.subr.mxu0 %v518
    %1213 = vmatpush1.msra.mxu0 %v517
    %1214 = vmatprep.subr.mxu0 %v522
    %1215 = vmatpush1.msra.mxu0 %v521
    %1216 = vmatprep.subr.mxu0 %v526
    %1217 = vmatpush1.msra.mxu0 %v525
    %1218 = vmatprep.subr.mxu0 %v530
    %1219 = vmatpush1.msra.mxu0 %v529
    %1220 = vmatprep.subr.mxu0 %v534
    %1221 = vmatpush1.msra.mxu0 %v533
    %1222 = vmatprep.subr.mxu0 %v538
    %1223 = vmatpush1.msra.mxu0 %v537
    %1224 = vmatprep.subr.mxu0 %v542
    %1225 = vmatpush1.msra.mxu0 %v541
    %1226 = vmatprep.subr.mxu0 %v546
    %1227 = vmatpush1.msra.mxu0 %v545
    %1228 = vmatprep.subr.mxu0 %v550
    %1229 = vmatpush1.msra.mxu0 %v549
    %1230 = vmatprep.subr.mxu0 %v554
    %1231 = vmatpush1.msra.mxu0 %v553
    %1232 = vmatprep.subr.mxu0 %v558
    %1233 = vmatpush1.msra.mxu0 %v557
    %1234 = vmatprep.subr.mxu0 %v562
    %1235 = vmatpush1.msra.mxu0 %v561
    %1236 = vmatprep.subr.mxu0 %v566
    %1237 = vmatpush1.msra.mxu0 %v565
    %1238 = vmatprep.subr.mxu0 %v570
    %1239 = vmatpush1.msra.mxu0 %v569
    %1240 = vmatprep.subr.mxu0 %v574
    %1241 = vmatpush1.msra.mxu0 %v573
    %1242 = vmatprep.subr.mxu0 %v578
    %1243 = vmatpush1.msra.mxu0 %v577
    %1244 = vmatprep.subr.mxu0 %v582
    %1245 = vmatpush1.msra.mxu0 %v581
    %1246 = vmatprep.mubr.f32.mxu0 %v66
    %1247 = vmatmul.mubr.f32.gmra.mrb[0].mxu0 %v65
    %v1248 = vpop.f32.mrb[0].mxu0
    %v1249 = vadd.f32 %v1178, %v1248
    %v1250 = vpop.f32.mrb[0].mxu0
    %v1251 = vadd.f32 %v1180, %v1250
    %1252 = vdwg.mxu0
    %1253 = vmatprep.subr.mxu0 %v586
    %1254 = vmatpush1.msra.mxu0 %v585
    %1255 = vmatprep.subr.mxu0 %v590
    %1256 = vmatpush1.msra.mxu0 %v589
    %1257 = vmatprep.subr.mxu0 %v594
    %1258 = vmatpush1.msra.mxu0 %v593
    %1259 = vmatprep.subr.mxu0 %v598
    %1260 = vmatpush1.msra.mxu0 %v597
    %1261 = vmatprep.subr.mxu0 %v602
    %1262 = vmatpush1.msra.mxu0 %v601
    %1263 = vmatprep.subr.mxu0 %v606
    %1264 = vmatpush1.msra.mxu0 %v605
    %1265 = vmatprep.subr.mxu0 %v610
    %1266 = vmatpush1.msra.mxu0 %v609
    %1267 = vmatprep.subr.mxu0 %v614
    %1268 = vmatpush1.msra.mxu0 %v613
    %1269 = vmatprep.subr.mxu0 %v618
    %1270 = vmatpush1.msra.mxu0 %v617
    %1271 = vmatprep.subr.mxu0 %v622
    %1272 = vmatpush1.msra.mxu0 %v621
    %1273 = vmatprep.subr.mxu0 %v626
    %1274 = vmatpush1.msra.mxu0 %v625
    %1275 = vmatprep.subr.mxu0 %v630
    %1276 = vmatpush1.msra.mxu0 %v629
    %1277 = vmatprep.subr.mxu0 %v634
    %1278 = vmatpush1.msra.mxu0 %v633
    %1279 = vmatprep.subr.mxu0 %v638
    %1280 = vmatpush1.msra.mxu0 %v637
    %1281 = vmatprep.subr.mxu0 %v642
    %1282 = vmatpush1.msra.mxu0 %v641
    %1283 = vmatprep.subr.mxu0 %v646
    %1284 = vmatpush1.msra.mxu0 %v645
    %1285 = vmatprep.subr.mxu0 %v650
    %1286 = vmatpush1.msra.mxu0 %v649
    %1287 = vmatprep.subr.mxu0 %v654
    %1288 = vmatpush1.msra.mxu0 %v653
    %1289 = vmatprep.subr.mxu0 %v658
    %1290 = vmatpush1.msra.mxu0 %v657
    %1291 = vmatprep.subr.mxu0 %v662
    %1292 = vmatpush1.msra.mxu0 %v661
    %1293 = vmatprep.subr.mxu0 %v666
    %1294 = vmatpush1.msra.mxu0 %v665
    %1295 = vmatprep.subr.mxu0 %v670
    %1296 = vmatpush1.msra.mxu0 %v669
    %1297 = vmatprep.subr.mxu0 %v674
    %1298 = vmatpush1.msra.mxu0 %v673
    %1299 = vmatprep.subr.mxu0 %v678
    %1300 = vmatpush1.msra.mxu0 %v677
    %1301 = vmatprep.subr.mxu0 %v682
    %1302 = vmatpush1.msra.mxu0 %v681
    %1303 = vmatprep.subr.mxu0 %v686
    %1304 = vmatpush1.msra.mxu0 %v685
    %1305 = vmatprep.subr.mxu0 %v690
    %1306 = vmatpush1.msra.mxu0 %v689
    %1307 = vmatprep.subr.mxu0 %v694
    %1308 = vmatpush1.msra.mxu0 %v693
    %1309 = vmatprep.subr.mxu0 %v698
    %1310 = vmatpush1.msra.mxu0 %v697
    %1311 = vmatprep.subr.mxu0 %v702
    %1312 = vmatpush1.msra.mxu0 %v701
    %1313 = vmatprep.subr.mxu0 %v706
    %1314 = vmatpush1.msra.mxu0 %v705
    %1315 = vmatprep.subr.mxu0 %v710
    %1316 = vmatpush1.msra.mxu0 %v709
    %1317 = vmatprep.mubr.f32.mxu0 %v68
    %1318 = vmatmul.mubr.f32.gmra.mrb[0].mxu0 %v67
    %v1319 = vpop.f32.mrb[0].mxu0
    %v1320 = vadd.f32 %v1249, %v1319
    %v1321 = vpop.f32.mrb[0].mxu0
    %v1322 = vadd.f32 %v1251, %v1321
    %1323 = vdwg.mxu0
    %1324 = vmatprep.subr.mxu0 %v714
    %1325 = vmatpush1.msra.mxu0 %v713
    %1326 = vmatprep.subr.mxu0 %v718
    %1327 = vmatpush1.msra.mxu0 %v717
    %1328 = vmatprep.subr.mxu0 %v722
    %1329 = vmatpush1.msra.mxu0 %v721
    %1330 = vmatprep.subr.mxu0 %v726
    %1331 = vmatpush1.msra.mxu0 %v725
    %1332 = vmatprep.subr.mxu0 %v730
    %1333 = vmatpush1.msra.mxu0 %v729
    %1334 = vmatprep.subr.mxu0 %v734
    %1335 = vmatpush1.msra.mxu0 %v733
    %1336 = vmatprep.subr.mxu0 %v738
    %1337 = vmatpush1.msra.mxu0 %v737
    %1338 = vmatprep.subr.mxu0 %v742
    %1339 = vmatpush1.msra.mxu0 %v741
    %1340 = vmatprep.subr.mxu0 %v746
    %1341 = vmatpush1.msra.mxu0 %v745
    %1342 = vmatprep.subr.mxu0 %v750
    %1343 = vmatpush1.msra.mxu0 %v749
    %1344 = vmatprep.subr.mxu0 %v754
    %1345 = vmatpush1.msra.mxu0 %v753
    %1346 = vmatprep.subr.mxu0 %v758
    %1347 = vmatpush1.msra.mxu0 %v757
    %1348 = vmatprep.subr.mxu0 %v762
    %1349 = vmatpush1.msra.mxu0 %v761
    %1350 = vmatprep.subr.mxu0 %v766
    %1351 = vmatpush1.msra.mxu0 %v765
    %1352 = vmatprep.subr.mxu0 %v770
    %1353 = vmatpush1.msra.mxu0 %v769
    %1354 = vmatprep.subr.mxu0 %v774
    %1355 = vmatpush1.msra.mxu0 %v773
    %1356 = vmatprep.subr.mxu0 %v778
    %1357 = vmatpush1.msra.mxu0 %v777
    %1358 = vmatprep.subr.mxu0 %v782
    %1359 = vmatpush1.msra.mxu0 %v781
    %1360 = vmatprep.subr.mxu0 %v786
    %1361 = vmatpush1.msra.mxu0 %v785
    %1362 = vmatprep.subr.mxu0 %v790
    %1363 = vmatpush1.msra.mxu0 %v789
    %1364 = vmatprep.subr.mxu0 %v794
    %1365 = vmatpush1.msra.mxu0 %v793
    %1366 = vmatprep.subr.mxu0 %v798
    %1367 = vmatpush1.msra.mxu0 %v797
    %1368 = vmatprep.subr.mxu0 %v802
    %1369 = vmatpush1.msra.mxu0 %v801
    %1370 = vmatprep.subr.mxu0 %v806
    %1371 = vmatpush1.msra.mxu0 %v805
    %1372 = vmatprep.subr.mxu0 %v810
    %1373 = vmatpush1.msra.mxu0 %v809
    %1374 = vmatprep.subr.mxu0 %v814
    %1375 = vmatpush1.msra.mxu0 %v813
    %1376 = vmatprep.subr.mxu0 %v818
    %1377 = vmatpush1.msra.mxu0 %v817
    %1378 = vmatprep.subr.mxu0 %v822
    %1379 = vmatpush1.msra.mxu0 %v821
    %1380 = vmatprep.subr.mxu0 %v826
    %1381 = vmatpush1.msra.mxu0 %v825
    %1382 = vmatprep.subr.mxu0 %v830
    %1383 = vmatpush1.msra.mxu0 %v829
    %1384 = vmatprep.subr.mxu0 %v834
    %1385 = vmatpush1.msra.mxu0 %v833
    %1386 = vmatprep.subr.mxu0 %v838
    %1387 = vmatpush1.msra.mxu0 %v837
    %1388 = vmatprep.mubr.f32.mxu0 %v70
    %1389 = vmatmul.mubr.f32.gmra.mrb[0].mxu0 %v69
    %v1390 = vpop.f32.mrb[0].mxu0
    %v1391 = vadd.f32 %v1320, %v1390
    %v1392 = vpop.f32.mrb[0].mxu0
    %v1393 = vadd.f32 %v1322, %v1392
    %1394 = vdwg.mxu0
    %1395 = vmatprep.subr.mxu0 %v842
    %1396 = vmatpush1.msra.mxu0 %v841
    %1397 = vmatprep.subr.mxu0 %v846
    %1398 = vmatpush1.msra.mxu0 %v845
    %1399 = vmatprep.subr.mxu0 %v850
    %1400 = vmatpush1.msra.mxu0 %v849
    %1401 = vmatprep.subr.mxu0 %v854
    %1402 = vmatpush1.msra.mxu0 %v853
    %1403 = vmatprep.subr.mxu0 %v858
    %1404 = vmatpush1.msra.mxu0 %v857
    %1405 = vmatprep.subr.mxu0 %v862
    %1406 = vmatpush1.msra.mxu0 %v861
    %1407 = vmatprep.subr.mxu0 %v866
    %1408 = vmatpush1.msra.mxu0 %v865
    %1409 = vmatprep.subr.mxu0 %v870
    %1410 = vmatpush1.msra.mxu0 %v869
    %1411 = vmatprep.subr.mxu0 %v874
    %1412 = vmatpush1.msra.mxu0 %v873
    %1413 = vmatprep.subr.mxu0 %v878
    %1414 = vmatpush1.msra.mxu0 %v877
    %1415 = vmatprep.subr.mxu0 %v882
    %1416 = vmatpush1.msra.mxu0 %v881
    %1417 = vmatprep.subr.mxu0 %v886
    %1418 = vmatpush1.msra.mxu0 %v885
    %1419 = vmatprep.subr.mxu0 %v890
    %1420 = vmatpush1.msra.mxu0 %v889
    %1421 = vmatprep.subr.mxu0 %v894
    %1422 = vmatpush1.msra.mxu0 %v893
    %1423 = vmatprep.subr.mxu0 %v898
    %1424 = vmatpush1.msra.mxu0 %v897
    %1425 = vmatprep.subr.mxu0 %v902
    %1426 = vmatpush1.msra.mxu0 %v901
    %1427 = vmatprep.subr.mxu0 %v906
    %1428 = vmatpush1.msra.mxu0 %v905
    %1429 = vmatprep.subr.mxu0 %v910
    %1430 = vmatpush1.msra.mxu0 %v909
    %1431 = vmatprep.subr.mxu0 %v914
    %1432 = vmatpush1.msra.mxu0 %v913
    %1433 = vmatprep.subr.mxu0 %v918
    %1434 = vmatpush1.msra.mxu0 %v917
    %1435 = vmatprep.subr.mxu0 %v922
    %1436 = vmatpush1.msra.mxu0 %v921
    %1437 = vmatprep.subr.mxu0 %v926
    %1438 = vmatpush1.msra.mxu0 %v925
    %1439 = vmatprep.subr.mxu0 %v930
    %1440 = vmatpush1.msra.mxu0 %v929
    %1441 = vmatprep.subr.mxu0 %v934
    %1442 = vmatpush1.msra.mxu0 %v933
    %1443 = vmatprep.subr.mxu0 %v938
    %1444 = vmatpush1.msra.mxu0 %v937
    %1445 = vmatprep.subr.mxu0 %v942
    %1446 = vmatpush1.msra.mxu0 %v941
    %1447 = vmatprep.subr.mxu0 %v946
    %1448 = vmatpush1.msra.mxu0 %v945
    %1449 = vmatprep.subr.mxu0 %v950
    %1450 = vmatpush1.msra.mxu0 %v949
    %1451 = vmatprep.subr.mxu0 %v954
    %1452 = vmatpush1.msra.mxu0 %v953
    %1453 = vmatprep.subr.mxu0 %v958
    %1454 = vmatpush1.msra.mxu0 %v957
    %1455 = vmatprep.subr.mxu0 %v962
    %1456 = vmatpush1.msra.mxu0 %v961
    %1457 = vmatprep.subr.mxu0 %v966
    %1458 = vmatpush1.msra.mxu0 %v965
    %1459 = vmatprep.mubr.f32.mxu0 %v72
    %1460 = vmatmul.mubr.f32.gmra.mrb[0].mxu0 %v71
    %v1461 = vpop.f32.mrb[0].mxu0
    %v1462 = vadd.f32 %v1391, %v1461
    %v1463 = vpop.f32.mrb[0].mxu0
    %v1464 = vadd.f32 %v1393, %v1463
    %1465 = vdwg.mxu0
    %1466 = vmatprep.subr.mxu0 %v76
    %1467 = vmatpush1.msra.mxu0 %v75
    %1468 = vmatprep.subr.mxu0 %v80
    %1469 = vmatpush1.msra.mxu0 %v79
    %1470 = vmatprep.subr.mxu0 %v84
    %1471 = vmatpush1.msra.mxu0 %v83
    %1472 = vmatprep.subr.mxu0 %v88
    %1473 = vmatpush1.msra.mxu0 %v87
    %1474 = vmatprep.subr.mxu0 %v92
    %1475 = vmatpush1.msra.mxu0 %v91
    %1476 = vmatprep.subr.mxu0 %v96
    %1477 = vmatpush1.msra.mxu0 %v95
    %1478 = vmatprep.subr.mxu0 %v100
    %1479 = vmatpush1.msra.mxu0 %v99
    %1480 = vmatprep.subr.mxu0 %v104
    %1481 = vmatpush1.msra.mxu0 %v103
    %1482 = vmatprep.subr.mxu0 %v108
    %1483 = vmatpush1.msra.mxu0 %v107
    %1484 = vmatprep.subr.mxu0 %v112
    %1485 = vmatpush1.msra.mxu0 %v111
    %1486 = vmatprep.subr.mxu0 %v116
    %1487 = vmatpush1.msra.mxu0 %v115
    %1488 = vmatprep.subr.mxu0 %v120
    %1489 = vmatpush1.msra.mxu0 %v119
    %1490 = vmatprep.subr.mxu0 %v124
    %1491 = vmatpush1.msra.mxu0 %v123
    %1492 = vmatprep.subr.mxu0 %v128
    %1493 = vmatpush1.msra.mxu0 %v127
    %1494 = vmatprep.subr.mxu0 %v132
    %1495 = vmatpush1.msra.mxu0 %v131
    %1496 = vmatprep.subr.mxu0 %v136
    %1497 = vmatpush1.msra.mxu0 %v135
    %1498 = vmatprep.subr.mxu0 %v140
    %1499 = vmatpush1.msra.mxu0 %v139
    %1500 = vmatprep.subr.mxu0 %v144
    %1501 = vmatpush1.msra.mxu0 %v143
    %1502 = vmatprep.subr.mxu0 %v148
    %1503 = vmatpush1.msra.mxu0 %v147
    %1504 = vmatprep.subr.mxu0 %v152
    %1505 = vmatpush1.msra.mxu0 %v151
    %1506 = vmatprep.subr.mxu0 %v156
    %1507 = vmatpush1.msra.mxu0 %v155
    %1508 = vmatprep.subr.mxu0 %v160
    %1509 = vmatpush1.msra.mxu0 %v159
    %1510 = vmatprep.subr.mxu0 %v164
    %1511 = vmatpush1.msra.mxu0 %v163
    %1512 = vmatprep.subr.mxu0 %v168
    %1513 = vmatpush1.msra.mxu0 %v167
    %1514 = vmatprep.subr.mxu0 %v172
    %1515 = vmatpush1.msra.mxu0 %v171
    %1516 = vmatprep.subr.mxu0 %v176
    %1517 = vmatpush1.msra.mxu0 %v175
    %1518 = vmatprep.subr.mxu0 %v180
    %1519 = vmatpush1.msra.mxu0 %v179
    %1520 = vmatprep.subr.mxu0 %v184
    %1521 = vmatpush1.msra.mxu0 %v183
    %1522 = vmatprep.subr.mxu0 %v188
    %1523 = vmatpush1.msra.mxu0 %v187
    %1524 = vmatprep.subr.mxu0 %v192
    %1525 = vmatpush1.msra.mxu0 %v191
    %1526 = vmatprep.subr.mxu0 %v196
    %1527 = vmatpush1.msra.mxu0 %v195
    %1528 = vmatprep.subr.mxu0 %v200
    %1529 = vmatpush1.msra.mxu0 %v199
    %1530 = vmatprep.mubr.f32.mxu0 %v60
    %1531 = vmatmul.mubr.f32.gmra.mrb[0].mxu0 %v59
    %v1532 = vpop.f32.mrb[0].mxu0
    %v1533 = vadd.f32 0.0, %v1532
    %v1534 = vpop.f32.mrb[0].mxu0
    %v1535 = vadd.f32 0.0, %v1534
    %1536 = vdwg.mxu0
    %1537 = vmatprep.subr.mxu0 %v204
    %1538 = vmatpush1.msra.mxu0 %v203
    %1539 = vmatprep.subr.mxu0 %v208
    %1540 = vmatpush1.msra.mxu0 %v207
    %1541 = vmatprep.subr.mxu0 %v212
    %1542 = vmatpush1.msra.mxu0 %v211
    %1543 = vmatprep.subr.mxu0 %v216
    %1544 = vmatpush1.msra.mxu0 %v215
    %1545 = vmatprep.subr.mxu0 %v220
    %1546 = vmatpush1.msra.mxu0 %v219
    %1547 = vmatprep.subr.mxu0 %v224
    %1548 = vmatpush1.msra.mxu0 %v223
    %1549 = vmatprep.subr.mxu0 %v228
    %1550 = vmatpush1.msra.mxu0 %v227
    %1551 = vmatprep.subr.mxu0 %v232
    %1552 = vmatpush1.msra.mxu0 %v231
    %1553 = vmatprep.subr.mxu0 %v236
    %1554 = vmatpush1.msra.mxu0 %v235
    %1555 = vmatprep.subr.mxu0 %v240
    %1556 = vmatpush1.msra.mxu0 %v239
    %1557 = vmatprep.subr.mxu0 %v244
    %1558 = vmatpush1.msra.mxu0 %v243
    %1559 = vmatprep.subr.mxu0 %v248
    %1560 = vmatpush1.msra.mxu0 %v247
    %1561 = vmatprep.subr.mxu0 %v252
    %1562 = vmatpush1.msra.mxu0 %v251
    %1563 = vmatprep.subr.mxu0 %v256
    %1564 = vmatpush1.msra.mxu0 %v255
    %1565 = vmatprep.subr.mxu0 %v260
    %1566 = vmatpush1.msra.mxu0 %v259
    %1567 = vmatprep.subr.mxu0 %v264
    %1568 = vmatpush1.msra.mxu0 %v263
    %1569 = vmatprep.subr.mxu0 %v268
    %1570 = vmatpush1.msra.mxu0 %v267
    %1571 = vmatprep.subr.mxu0 %v272
    %1572 = vmatpush1.msra.mxu0 %v271
    %1573 = vmatprep.subr.mxu0 %v276
    %1574 = vmatpush1.msra.mxu0 %v275
    %1575 = vmatprep.subr.mxu0 %v280
    %1576 = vmatpush1.msra.mxu0 %v279
    %1577 = vmatprep.subr.mxu0 %v284
    %1578 = vmatpush1.msra.mxu0 %v283
    %1579 = vmatprep.subr.mxu0 %v288
    %1580 = vmatpush1.msra.mxu0 %v287
    %1581 = vmatprep.subr.mxu0 %v292
    %1582 = vmatpush1.msra.mxu0 %v291
    %1583 = vmatprep.subr.mxu0 %v296
    %1584 = vmatpush1.msra.mxu0 %v295
    %1585 = vmatprep.subr.mxu0 %v300
    %1586 = vmatpush1.msra.mxu0 %v299
    %1587 = vmatprep.subr.mxu0 %v304
    %1588 = vmatpush1.msra.mxu0 %v303
    %1589 = vmatprep.subr.mxu0 %v308
    %1590 = vmatpush1.msra.mxu0 %v307
    %1591 = vmatprep.subr.mxu0 %v312
    %1592 = vmatpush1.msra.mxu0 %v311
    %1593 = vmatprep.subr.mxu0 %v316
    %1594 = vmatpush1.msra.mxu0 %v315
    %1595 = vmatprep.subr.mxu0 %v320
    %1596 = vmatpush1.msra.mxu0 %v319
    %1597 = vmatprep.subr.mxu0 %v324
    %1598 = vmatpush1.msra.mxu0 %v323
    %1599 = vmatprep.subr.mxu0 %v328
    %1600 = vmatpush1.msra.mxu0 %v327
    %1601 = vmatprep.mubr.f32.mxu0 %v62
    %1602 = vmatmul.mubr.f32.gmra.mrb[0].mxu0 %v61
    %v1603 = vpop.f32.mrb[0].mxu0
    %v1604 = vadd.f32 %v1533, %v1603
    %v1605 = vpop.f32.mrb[0].mxu0
    %v1606 = vadd.f32 %v1535, %v1605
    %1607 = vdwg.mxu0
    %1608 = vmatprep.subr.mxu0 %v332
    %1609 = vmatpush1.msra.mxu0 %v331
    %1610 = vmatprep.subr.mxu0 %v336
    %1611 = vmatpush1.msra.mxu0 %v335
    %1612 = vmatprep.subr.mxu0 %v340
    %1613 = vmatpush1.msra.mxu0 %v339
    %1614 = vmatprep.subr.mxu0 %v344
    %1615 = vmatpush1.msra.mxu0 %v343
    %1616 = vmatprep.subr.mxu0 %v348
    %1617 = vmatpush1.msra.mxu0 %v347
    %1618 = vmatprep.subr.mxu0 %v352
    %1619 = vmatpush1.msra.mxu0 %v351
    %1620 = vmatprep.subr.mxu0 %v356
    %1621 = vmatpush1.msra.mxu0 %v355
    %1622 = vmatprep.subr.mxu0 %v360
    %1623 = vmatpush1.msra.mxu0 %v359
    %1624 = vmatprep.subr.mxu0 %v364
    %1625 = vmatpush1.msra.mxu0 %v363
    %1626 = vmatprep.subr.mxu0 %v368
    %1627 = vmatpush1.msra.mxu0 %v367
    %1628 = vmatprep.subr.mxu0 %v372
    %1629 = vmatpush1.msra.mxu0 %v371
    %1630 = vmatprep.subr.mxu0 %v376
    %1631 = vmatpush1.msra.mxu0 %v375
    %1632 = vmatprep.subr.mxu0 %v380
    %1633 = vmatpush1.msra.mxu0 %v379
    %1634 = vmatprep.subr.mxu0 %v384
    %1635 = vmatpush1.msra.mxu0 %v383
    %1636 = vmatprep.subr.mxu0 %v388
    %1637 = vmatpush1.msra.mxu0 %v387
    %1638 = vmatprep.subr.mxu0 %v392
    %1639 = vmatpush1.msra.mxu0 %v391
    %1640 = vmatprep.subr.mxu0 %v396
    %1641 = vmatpush1.msra.mxu0 %v395
    %1642 = vmatprep.subr.mxu0 %v400
    %1643 = vmatpush1.msra.mxu0 %v399
    %1644 = vmatprep.subr.mxu0 %v404
    %1645 = vmatpush1.msra.mxu0 %v403
    %1646 = vmatprep.subr.mxu0 %v408
    %1647 = vmatpush1.msra.mxu0 %v407
    %1648 = vmatprep.subr.mxu0 %v412
    %1649 = vmatpush1.msra.mxu0 %v411
    %1650 = vmatprep.subr.mxu0 %v416
    %1651 = vmatpush1.msra.mxu0 %v415
    %1652 = vmatprep.subr.mxu0 %v420
    %1653 = vmatpush1.msra.mxu0 %v419
    %1654 = vmatprep.subr.mxu0 %v424
    %1655 = vmatpush1.msra.mxu0 %v423
    %1656 = vmatprep.subr.mxu0 %v428
    %1657 = vmatpush1.msra.mxu0 %v427
    %1658 = vmatprep.subr.mxu0 %v432
    %1659 = vmatpush1.msra.mxu0 %v431
    %1660 = vmatprep.subr.mxu0 %v436
    %1661 = vmatpush1.msra.mxu0 %v435
    %1662 = vmatprep.subr.mxu0 %v440
    %1663 = vmatpush1.msra.mxu0 %v439
    %1664 = vmatprep.subr.mxu0 %v444
    %1665 = vmatpush1.msra.mxu0 %v443
    %1666 = vmatprep.subr.mxu0 %v448
    %1667 = vmatpush1.msra.mxu0 %v447
    %1668 = vmatprep.subr.mxu0 %v452
    %1669 = vmatpush1.msra.mxu0 %v451
    %1670 = vmatprep.subr.mxu0 %v456
    %1671 = vmatpush1.msra.mxu0 %v455
    %1672 = vmatprep.mubr.f32.mxu0 %v64
    %1673 = vmatmul.mubr.f32.gmra.mrb[0].mxu0 %v63
    %v1674 = vpop.f32.mrb[0].mxu0
    %v1675 = vadd.f32 %v1604, %v1674
    %v1676 = vpop.f32.mrb[0].mxu0
    %v1677 = vadd.f32 %v1606, %v1676
    %1678 = vdwg.mxu0
    %1679 = vmatprep.subr.mxu0 %v460
    %1680 = vmatpush1.msra.mxu0 %v459
    %1681 = vmatprep.subr.mxu0 %v464
    %1682 = vmatpush1.msra.mxu0 %v463
    %1683 = vmatprep.subr.mxu0 %v468
    %1684 = vmatpush1.msra.mxu0 %v467
    %1685 = vmatprep.subr.mxu0 %v472
    %1686 = vmatpush1.msra.mxu0 %v471
    %1687 = vmatprep.subr.mxu0 %v476
    %1688 = vmatpush1.msra.mxu0 %v475
    %1689 = vmatprep.subr.mxu0 %v480
    %1690 = vmatpush1.msra.mxu0 %v479
    %1691 = vmatprep.subr.mxu0 %v484
    %1692 = vmatpush1.msra.mxu0 %v483
    %1693 = vmatprep.subr.mxu0 %v488
    %1694 = vmatpush1.msra.mxu0 %v487
    %1695 = vmatprep.subr.mxu0 %v492
    %1696 = vmatpush1.msra.mxu0 %v491
    %1697 = vmatprep.subr.mxu0 %v496
    %1698 = vmatpush1.msra.mxu0 %v495
    %1699 = vmatprep.subr.mxu0 %v500
    %1700 = vmatpush1.msra.mxu0 %v499
    %1701 = vmatprep.subr.mxu0 %v504
    %1702 = vmatpush1.msra.mxu0 %v503
    %1703 = vmatprep.subr.mxu0 %v508
    %1704 = vmatpush1.msra.mxu0 %v507
    %1705 = vmatprep.subr.mxu0 %v512
    %1706 = vmatpush1.msra.mxu0 %v511
    %1707 = vmatprep.subr.mxu0 %v516
    %1708 = vmatpush1.msra.mxu0 %v515
    %1709 = vmatprep.subr.mxu0 %v520
    %1710 = vmatpush1.msra.mxu0 %v519
    %1711 = vmatprep.subr.mxu0 %v524
    %1712 = vmatpush1.msra.mxu0 %v523
    %1713 = vmatprep.subr.mxu0 %v528
    %1714 = vmatpush1.msra.mxu0 %v527
    %1715 = vmatprep.subr.mxu0 %v532
    %1716 = vmatpush1.msra.mxu0 %v531
    %1717 = vmatprep.subr.mxu0 %v536
    %1718 = vmatpush1.msra.mxu0 %v535
    %1719 = vmatprep.subr.mxu0 %v540
    %1720 = vmatpush1.msra.mxu0 %v539
    %1721 = vmatprep.subr.mxu0 %v544
    %1722 = vmatpush1.msra.mxu0 %v543
    %1723 = vmatprep.subr.mxu0 %v548
    %1724 = vmatpush1.msra.mxu0 %v547
    %1725 = vmatprep.subr.mxu0 %v552
    %1726 = vmatpush1.msra.mxu0 %v551
    %1727 = vmatprep.subr.mxu0 %v556
    %1728 = vmatpush1.msra.mxu0 %v555
    %1729 = vmatprep.subr.mxu0 %v560
    %1730 = vmatpush1.msra.mxu0 %v559
    %1731 = vmatprep.subr.mxu0 %v564
    %1732 = vmatpush1.msra.mxu0 %v563
    %1733 = vmatprep.subr.mxu0 %v568
    %1734 = vmatpush1.msra.mxu0 %v567
    %1735 = vmatprep.subr.mxu0 %v572
    %1736 = vmatpush1.msra.mxu0 %v571
    %1737 = vmatprep.subr.mxu0 %v576
    %1738 = vmatpush1.msra.mxu0 %v575
    %1739 = vmatprep.subr.mxu0 %v580
    %1740 = vmatpush1.msra.mxu0 %v579
    %1741 = vmatprep.subr.mxu0 %v584
    %1742 = vmatpush1.msra.mxu0 %v583
    %1743 = vmatprep.mubr.f32.mxu0 %v66
    %1744 = vmatmul.mubr.f32.gmra.mrb[0].mxu0 %v65
    %v1745 = vpop.f32.mrb[0].mxu0
    %v1746 = vadd.f32 %v1675, %v1745
    %v1747 = vpop.f32.mrb[0].mxu0
    %v1748 = vadd.f32 %v1677, %v1747
    %1749 = vdwg.mxu0
    %1750 = vmatprep.subr.mxu0 %v588
    %1751 = vmatpush1.msra.mxu0 %v587
    %1752 = vmatprep.subr.mxu0 %v592
    %1753 = vmatpush1.msra.mxu0 %v591
    %1754 = vmatprep.subr.mxu0 %v596
    %1755 = vmatpush1.msra.mxu0 %v595
    %1756 = vmatprep.subr.mxu0 %v600
    %1757 = vmatpush1.msra.mxu0 %v599
    %1758 = vmatprep.subr.mxu0 %v604
    %1759 = vmatpush1.msra.mxu0 %v603
    %1760 = vmatprep.subr.mxu0 %v608
    %1761 = vmatpush1.msra.mxu0 %v607
    %1762 = vmatprep.subr.mxu0 %v612
    %1763 = vmatpush1.msra.mxu0 %v611
    %1764 = vmatprep.subr.mxu0 %v616
    %1765 = vmatpush1.msra.mxu0 %v615
    %1766 = vmatprep.subr.mxu0 %v620
    %1767 = vmatpush1.msra.mxu0 %v619
    %1768 = vmatprep.subr.mxu0 %v624
    %1769 = vmatpush1.msra.mxu0 %v623
    %1770 = vmatprep.subr.mxu0 %v628
    %1771 = vmatpush1.msra.mxu0 %v627
    %1772 = vmatprep.subr.mxu0 %v632
    %1773 = vmatpush1.msra.mxu0 %v631
    %1774 = vmatprep.subr.mxu0 %v636
    %1775 = vmatpush1.msra.mxu0 %v635
    %1776 = vmatprep.subr.mxu0 %v640
    %1777 = vmatpush1.msra.mxu0 %v639
    %1778 = vmatprep.subr.mxu0 %v644
    %1779 = vmatpush1.msra.mxu0 %v643
    %1780 = vmatprep.subr.mxu0 %v648
    %1781 = vmatpush1.msra.mxu0 %v647
    %1782 = vmatprep.subr.mxu0 %v652
    %1783 = vmatpush1.msra.mxu0 %v651
    %1784 = vmatprep.subr.mxu0 %v656
    %1785 = vmatpush1.msra.mxu0 %v655
    %1786 = vmatprep.subr.mxu0 %v660
    %1787 = vmatpush1.msra.mxu0 %v659
    %1788 = vmatprep.subr.mxu0 %v664
    %1789 = vmatpush1.msra.mxu0 %v663
    %1790 = vmatprep.subr.mxu0 %v668
    %1791 = vmatpush1.msra.mxu0 %v667
    %1792 = vmatprep.subr.mxu0 %v672
    %1793 = vmatpush1.msra.mxu0 %v671
    %1794 = vmatprep.subr.mxu0 %v676
    %1795 = vmatpush1.msra.mxu0 %v675
    %1796 = vmatprep.subr.mxu0 %v680
    %1797 = vmatpush1.msra.mxu0 %v679
    %1798 = vmatprep.subr.mxu0 %v684
    %1799 = vmatpush1.msra.mxu0 %v683
    %1800 = vmatprep.subr.mxu0 %v688
    %1801 = vmatpush1.msra.mxu0 %v687
    %1802 = vmatprep.subr.mxu0 %v692
    %1803 = vmatpush1.msra.mxu0 %v691
    %1804 = vmatprep.subr.mxu0 %v696
    %1805 = vmatpush1.msra.mxu0 %v695
    %1806 = vmatprep.subr.mxu0 %v700
    %1807 = vmatpush1.msra.mxu0 %v699
    %1808 = vmatprep.subr.mxu0 %v704
    %1809 = vmatpush1.msra.mxu0 %v703
    %1810 = vmatprep.subr.mxu0 %v708
    %1811 = vmatpush1.msra.mxu0 %v707
    %1812 = vmatprep.subr.mxu0 %v712
    %1813 = vmatpush1.msra.mxu0 %v711
    %1814 = vmatprep.mubr.f32.mxu0 %v68
    %1815 = vmatmul.mubr.f32.gmra.mrb[0].mxu0 %v67
    %v1816 = vpop.f32.mrb[0].mxu0
    %v1817 = vadd.f32 %v1746, %v1816
    %v1818 = vpop.f32.mrb[0].mxu0
    %v1819 = vadd.f32 %v1748, %v1818
    %1820 = vdwg.mxu0
    %1821 = vmatprep.subr.mxu0 %v716
    %1822 = vmatpush1.msra.mxu0 %v715
    %1823 = vmatprep.subr.mxu0 %v720
    %1824 = vmatpush1.msra.mxu0 %v719
    %1825 = vmatprep.subr.mxu0 %v724
    %1826 = vmatpush1.msra.mxu0 %v723
    %1827 = vmatprep.subr.mxu0 %v728
    %1828 = vmatpush1.msra.mxu0 %v727
    %1829 = vmatprep.subr.mxu0 %v732
    %1830 = vmatpush1.msra.mxu0 %v731
    %1831 = vmatprep.subr.mxu0 %v736
    %1832 = vmatpush1.msra.mxu0 %v735
    %1833 = vmatprep.subr.mxu0 %v740
    %1834 = vmatpush1.msra.mxu0 %v739
    %1835 = vmatprep.subr.mxu0 %v744
    %1836 = vmatpush1.msra.mxu0 %v743
    %1837 = vmatprep.subr.mxu0 %v748
    %1838 = vmatpush1.msra.mxu0 %v747
    %1839 = vmatprep.subr.mxu0 %v752
    %1840 = vmatpush1.msra.mxu0 %v751
    %1841 = vmatprep.subr.mxu0 %v756
    %1842 = vmatpush1.msra.mxu0 %v755
    %1843 = vmatprep.subr.mxu0 %v760
    %1844 = vmatpush1.msra.mxu0 %v759
    %1845 = vmatprep.subr.mxu0 %v764
    %1846 = vmatpush1.msra.mxu0 %v763
    %1847 = vmatprep.subr.mxu0 %v768
    %1848 = vmatpush1.msra.mxu0 %v767
    %1849 = vmatprep.subr.mxu0 %v772
    %1850 = vmatpush1.msra.mxu0 %v771
    %1851 = vmatprep.subr.mxu0 %v776
    %1852 = vmatpush1.msra.mxu0 %v775
    %1853 = vmatprep.subr.mxu0 %v780
    %1854 = vmatpush1.msra.mxu0 %v779
    %1855 = vmatprep.subr.mxu0 %v784
    %1856 = vmatpush1.msra.mxu0 %v783
    %1857 = vmatprep.subr.mxu0 %v788
    %1858 = vmatpush1.msra.mxu0 %v787
    %1859 = vmatprep.subr.mxu0 %v792
    %1860 = vmatpush1.msra.mxu0 %v791
    %1861 = vmatprep.subr.mxu0 %v796
    %1862 = vmatpush1.msra.mxu0 %v795
    %1863 = vmatprep.subr.mxu0 %v800
    %1864 = vmatpush1.msra.mxu0 %v799
    %1865 = vmatprep.subr.mxu0 %v804
    %1866 = vmatpush1.msra.mxu0 %v803
    %1867 = vmatprep.subr.mxu0 %v808
    %1868 = vmatpush1.msra.mxu0 %v807
    %1869 = vmatprep.subr.mxu0 %v812
    %1870 = vmatpush1.msra.mxu0 %v811
    %1871 = vmatprep.subr.mxu0 %v816
    %1872 = vmatpush1.msra.mxu0 %v815
    %1873 = vmatprep.subr.mxu0 %v820
    %1874 = vmatpush1.msra.mxu0 %v819
    %1875 = vmatprep.subr.mxu0 %v824
    %1876 = vmatpush1.msra.mxu0 %v823
    %1877 = vmatprep.subr.mxu0 %v828
    %1878 = vmatpush1.msra.mxu0 %v827
    %1879 = vmatprep.subr.mxu0 %v832
    %1880 = vmatpush1.msra.mxu0 %v831
    %1881 = vmatprep.subr.mxu0 %v836
    %1882 = vmatpush1.msra.mxu0 %v835
    %1883 = vmatprep.subr.mxu0 %v840
    %1884 = vmatpush1.msra.mxu0 %v839
    %1885 = vmatprep.mubr.f32.mxu0 %v70
    %1886 = vmatmul.mubr.f32.gmra.mrb[0].mxu0 %v69
    %v1887 = vpop.f32.mrb[0].mxu0
    %v1888 = vadd.f32 %v1817, %v1887
    %v1889 = vpop.f32.mrb[0].mxu0
    %v1890 = vadd.f32 %v1819, %v1889
    %1891 = vdwg.mxu0
    %1892 = vmatprep.subr.mxu0 %v844
    %1893 = vmatpush1.msra.mxu0 %v843
    %1894 = vmatprep.subr.mxu0 %v848
    %1895 = vmatpush1.msra.mxu0 %v847
    %1896 = vmatprep.subr.mxu0 %v852
    %1897 = vmatpush1.msra.mxu0 %v851
    %1898 = vmatprep.subr.mxu0 %v856
    %1899 = vmatpush1.msra.mxu0 %v855
    %1900 = vmatprep.subr.mxu0 %v860
    %1901 = vmatpush1.msra.mxu0 %v859
    %1902 = vmatprep.subr.mxu0 %v864
    %1903 = vmatpush1.msra.mxu0 %v863
    %1904 = vmatprep.subr.mxu0 %v868
    %1905 = vmatpush1.msra.mxu0 %v867
    %1906 = vmatprep.subr.mxu0 %v872
    %1907 = vmatpush1.msra.mxu0 %v871
    %1908 = vmatprep.subr.mxu0 %v876
    %1909 = vmatpush1.msra.mxu0 %v875
    %1910 = vmatprep.subr.mxu0 %v880
    %1911 = vmatpush1.msra.mxu0 %v879
    %1912 = vmatprep.subr.mxu0 %v884
    %1913 = vmatpush1.msra.mxu0 %v883
    %1914 = vmatprep.subr.mxu0 %v888
    %1915 = vmatpush1.msra.mxu0 %v887
    %1916 = vmatprep.subr.mxu0 %v892
    %1917 = vmatpush1.msra.mxu0 %v891
    %1918 = vmatprep.subr.mxu0 %v896
    %1919 = vmatpush1.msra.mxu0 %v895
    %1920 = vmatprep.subr.mxu0 %v900
    %1921 = vmatpush1.msra.mxu0 %v899
    %1922 = vmatprep.subr.mxu0 %v904
    %1923 = vmatpush1.msra.mxu0 %v903
    %1924 = vmatprep.subr.mxu0 %v908
    %1925 = vmatpush1.msra.mxu0 %v907
    %1926 = vmatprep.subr.mxu0 %v912
    %1927 = vmatpush1.msra.mxu0 %v911
    %1928 = vmatprep.subr.mxu0 %v916
    %1929 = vmatpush1.msra.mxu0 %v915
    %1930 = vmatprep.subr.mxu0 %v920
    %1931 = vmatpush1.msra.mxu0 %v919
    %1932 = vmatprep.subr.mxu0 %v924
    %1933 = vmatpush1.msra.mxu0 %v923
    %1934 = vmatprep.subr.mxu0 %v928
    %1935 = vmatpush1.msra.mxu0 %v927
    %1936 = vmatprep.subr.mxu0 %v932
    %1937 = vmatpush1.msra.mxu0 %v931
    %1938 = vmatprep.subr.mxu0 %v936
    %1939 = vmatpush1.msra.mxu0 %v935
    %1940 = vmatprep.subr.mxu0 %v940
    %1941 = vmatpush1.msra.mxu0 %v939
    %1942 = vmatprep.subr.mxu0 %v944
    %1943 = vmatpush1.msra.mxu0 %v943
    %1944 = vmatprep.subr.mxu0 %v948
    %1945 = vmatpush1.msra.mxu0 %v947
    %1946 = vmatprep.subr.mxu0 %v952
    %1947 = vmatpush1.msra.mxu0 %v951
    %1948 = vmatprep.subr.mxu0 %v956
    %1949 = vmatpush1.msra.mxu0 %v955
    %1950 = vmatprep.subr.mxu0 %v960
    %1951 = vmatpush1.msra.mxu0 %v959
    %1952 = vmatprep.subr.mxu0 %v964
    %1953 = vmatpush1.msra.mxu0 %v963
    %1954 = vmatprep.subr.mxu0 %v968
    %1955 = vmatpush1.msra.mxu0 %v967
    %1956 = vmatprep.mubr.f32.mxu0 %v72
    %1957 = vmatmul.mubr.f32.gmra.mrb[0].mxu0 %v71
    %v1958 = vpop.f32.mrb[0].mxu0
    %v1959 = vadd.f32 %v1888, %v1958
    %v1960 = vpop.f32.mrb[0].mxu0
    %v1961 = vadd.f32 %v1890, %v1960
    %1962 = vdwg.mxu0
    %vm1963 = vcmp.gt.f32.partialorder %v1462, 0.0
    %vm1964 = vcmp.gt.f32.partialorder %v1464, 0.0
    %vm1965 = vcmp.gt.f32.partialorder %v1959, 0.0
    %vm1966 = vcmp.gt.f32.partialorder %v1961, 0.0
    %v1967 = vmul.f32 %v1462, 0.2
    %v1968 = vmul.f32 %v1464, 0.2
    %v1969 = vmul.f32 %v1959, 0.2
    %v1970 = vmul.f32 %v1961, 0.2
    %v1971 = vsel %vm1963, %v1462, %v1967
    %v1972 = vsel %vm1964, %v1464, %v1968
    %v1973 = vsel %vm1965, %v1959, %v1969
    %v1974 = vsel %vm1966, %v1961, %v1970
    %v1975 = vld [vmem:[#allocation4] sm:$0xff]
    %v1976 = vld [vmem:[#allocation4 + $0x8] sm:$0xff]
    %v1977 = vld [vmem:[#allocation4 + $0x10] sm:$0xff]
    %v1978 = vld [vmem:[#allocation4 + $0x18] sm:$0xff]
    %v1979 = vld [vmem:[#allocation4 + $0x20] sm:$0xff]
    %v1980 = vld [vmem:[#allocation4 + $0x28] sm:$0xff]
    %v1981 = vld [vmem:[#allocation4 + $0x30] sm:$0xff]
    %v1982 = vld [vmem:[#allocation4 + $0x38] sm:$0xff]
    %v1983 = vld [vmem:[#allocation4 + $0x40] sm:$0xff]
    %v1984 = vld [vmem:[#allocation4 + $0x48] sm:$0xff]
    %v1985 = vld [vmem:[#allocation4 + $0x50] sm:$0xff]
    %v1986 = vld [vmem:[#allocation4 + $0x58] sm:$0xff]
    %v1987 = vld [vmem:[#allocation4 + $0x60] sm:$0xff]
    %v1988 = vld [vmem:[#allocation4 + $0x68] sm:$0xff]
    %v1989 = vld [vmem:[#allocation4 + $0x70] sm:$0xff]
    %v1990 = vld [vmem:[#allocation4 + $0x78] sm:$0xff]
    %v1991 = vld [vmem:[#allocation4 + $0x80] sm:$0xff]
    %v1992 = vld [vmem:[#allocation4 + $0x88] sm:$0xff]
    %v1993 = vld [vmem:[#allocation4 + $0x90] sm:$0xff]
    %v1994 = vld [vmem:[#allocation4 + $0x98] sm:$0xff]
    %v1995 = vld [vmem:[#allocation4 + $0xa0] sm:$0xff]
    %v1996 = vld [vmem:[#allocation4 + $0xa8] sm:$0xff]
    %v1997 = vld [vmem:[#allocation4 + $0xb0] sm:$0xff]
    %v1998 = vld [vmem:[#allocation4 + $0xb8] sm:$0xff]
    %v1999 = vld [vmem:[#allocation4 + $0xc0] sm:$0xff]
    %v2000 = vld [vmem:[#allocation4 + $0xc8] sm:$0xff]
    %v2001 = vld [vmem:[#allocation4 + $0xd0] sm:$0xff]
    %v2002 = vld [vmem:[#allocation4 + $0xd8] sm:$0xff]
    %v2003 = vld [vmem:[#allocation4 + $0xe0] sm:$0xff]
    %v2004 = vld [vmem:[#allocation4 + $0xe8] sm:$0xff]
    %v2005 = vld [vmem:[#allocation4 + $0xf0] sm:$0xff]
    %v2006 = vld [vmem:[#allocation4 + $0xf8] sm:$0xff]
    %v2007 = vld [vmem:[#allocation4 + $0x100] sm:$0xff]
    %v2008 = vld [vmem:[#allocation4 + $0x108] sm:$0xff]
    %v2009 = vld [vmem:[#allocation4 + $0x110] sm:$0xff]
    %v2010 = vld [vmem:[#allocation4 + $0x118] sm:$0xff]
    %v2011 = vld [vmem:[#allocation4 + $0x120] sm:$0xff]
    %v2012 = vld [vmem:[#allocation4 + $0x128] sm:$0xff]
    %v2013 = vld [vmem:[#allocation4 + $0x130] sm:$0xff]
    %v2014 = vld [vmem:[#allocation4 + $0x138] sm:$0xff]
    %v2015 = vld [vmem:[#allocation4 + $0x140] sm:$0xff]
    %v2016 = vld [vmem:[#allocation4 + $0x148] sm:$0xff]
    %v2017 = vld [vmem:[#allocation4 + $0x150] sm:$0xff]
    %v2018 = vld [vmem:[#allocation4 + $0x158] sm:$0xff]
    %v2019 = vld [vmem:[#allocation4 + $0x160] sm:$0xff]
    %v2020 = vld [vmem:[#allocation4 + $0x168] sm:$0xff]
    %v2021 = vld [vmem:[#allocation4 + $0x170] sm:$0xff]
    %v2022 = vld [vmem:[#allocation4 + $0x178] sm:$0xff]
    %v2023 = vld [vmem:[#allocation4 + $0x180] sm:$0xff]
    %v2024 = vld [vmem:[#allocation4 + $0x188] sm:$0xff]
    %v2025 = vld [vmem:[#allocation4 + $0x190] sm:$0xff]
    %v2026 = vld [vmem:[#allocation4 + $0x198] sm:$0xff]
    %v2027 = vld [vmem:[#allocation4 + $0x1a0] sm:$0xff]
    %v2028 = vld [vmem:[#allocation4 + $0x1a8] sm:$0xff]
    %v2029 = vld [vmem:[#allocation4 + $0x1b0] sm:$0xff]
    %v2030 = vld [vmem:[#allocation4 + $0x1b8] sm:$0xff]
    %v2031 = vld [vmem:[#allocation4 + $0x1c0] sm:$0xff]
    %v2032 = vld [vmem:[#allocation4 + $0x1c8] sm:$0xff]
    %v2033 = vld [vmem:[#allocation4 + $0x1d0] sm:$0xff]
    %v2034 = vld [vmem:[#allocation4 + $0x1d8] sm:$0xff]
    %v2035 = vld [vmem:[#allocation4 + $0x1e0] sm:$0xff]
    %v2036 = vld [vmem:[#allocation4 + $0x1e8] sm:$0xff]
    %v2037 = vld [vmem:[#allocation4 + $0x1f0] sm:$0xff]
    %v2038 = vld [vmem:[#allocation4 + $0x1f8] sm:$0xff]
    %v2039 = vld [vmem:[#allocation4 + $0x200] sm:$0xff]
    %v2040 = vld [vmem:[#allocation4 + $0x208] sm:$0xff]
    %v2041 = vld [vmem:[#allocation4 + $0x210] sm:$0xff]
    %v2042 = vld [vmem:[#allocation4 + $0x218] sm:$0xff]
    %v2043 = vld [vmem:[#allocation4 + $0x220] sm:$0xff]
    %v2044 = vld [vmem:[#allocation4 + $0x228] sm:$0xff]
    %v2045 = vld [vmem:[#allocation4 + $0x230] sm:$0xff]
    %v2046 = vld [vmem:[#allocation4 + $0x238] sm:$0xff]
    %v2047 = vld [vmem:[#allocation4 + $0x240] sm:$0xff]
    %v2048 = vld [vmem:[#allocation4 + $0x248] sm:$0xff]
    %v2049 = vld [vmem:[#allocation4 + $0x250] sm:$0xff]
    %v2050 = vld [vmem:[#allocation4 + $0x258] sm:$0xff]
    %v2051 = vld [vmem:[#allocation4 + $0x260] sm:$0xff]
    %v2052 = vld [vmem:[#allocation4 + $0x268] sm:$0xff]
    %v2053 = vld [vmem:[#allocation4 + $0x270] sm:$0xff]
    %v2054 = vld [vmem:[#allocation4 + $0x278] sm:$0xff]
    %v2055 = vld [vmem:[#allocation4 + $0x280] sm:$0xff]
    %v2056 = vld [vmem:[#allocation4 + $0x288] sm:$0xff]
    %v2057 = vld [vmem:[#allocation4 + $0x290] sm:$0xff]
    %v2058 = vld [vmem:[#allocation4 + $0x298] sm:$0xff]
    %v2059 = vld [vmem:[#allocation4 + $0x2a0] sm:$0xff]
    %v2060 = vld [vmem:[#allocation4 + $0x2a8] sm:$0xff]
    %v2061 = vld [vmem:[#allocation4 + $0x2b0] sm:$0xff]
    %v2062 = vld [vmem:[#allocation4 + $0x2b8] sm:$0xff]
    %v2063 = vld [vmem:[#allocation4 + $0x2c0] sm:$0xff]
    %v2064 = vld [vmem:[#allocation4 + $0x2c8] sm:$0xff]
    %v2065 = vld [vmem:[#allocation4 + $0x2d0] sm:$0xff]
    %v2066 = vld [vmem:[#allocation4 + $0x2d8] sm:$0xff]
    %v2067 = vld [vmem:[#allocation4 + $0x2e0] sm:$0xff]
    %v2068 = vld [vmem:[#allocation4 + $0x2e8] sm:$0xff]
    %v2069 = vld [vmem:[#allocation4 + $0x2f0] sm:$0xff]
    %v2070 = vld [vmem:[#allocation4 + $0x2f8] sm:$0xff]
    %v2071 = vld [vmem:[#allocation4 + $0x300] sm:$0xff]
    %v2072 = vld [vmem:[#allocation4 + $0x308] sm:$0xff]
    %v2073 = vld [vmem:[#allocation4 + $0x310] sm:$0xff]
    %v2074 = vld [vmem:[#allocation4 + $0x318] sm:$0xff]
    %v2075 = vld [vmem:[#allocation4 + $0x320] sm:$0xff]
    %v2076 = vld [vmem:[#allocation4 + $0x328] sm:$0xff]
    %v2077 = vld [vmem:[#allocation4 + $0x330] sm:$0xff]
    %v2078 = vld [vmem:[#allocation4 + $0x338] sm:$0xff]
    %v2079 = vld [vmem:[#allocation4 + $0x340] sm:$0xff]
    %v2080 = vld [vmem:[#allocation4 + $0x348] sm:$0xff]
    %v2081 = vld [vmem:[#allocation4 + $0x350] sm:$0xff]
    %v2082 = vld [vmem:[#allocation4 + $0x358] sm:$0xff]
    %v2083 = vld [vmem:[#allocation4 + $0x360] sm:$0xff]
    %v2084 = vld [vmem:[#allocation4 + $0x368] sm:$0xff]
    %v2085 = vld [vmem:[#allocation4 + $0x370] sm:$0xff]
    %v2086 = vld [vmem:[#allocation4 + $0x378] sm:$0xff]
    %v2087 = vld [vmem:[#allocation4 + $0x380] sm:$0xff]
    %v2088 = vld [vmem:[#allocation4 + $0x388] sm:$0xff]
    %v2089 = vld [vmem:[#allocation4 + $0x390] sm:$0xff]
    %v2090 = vld [vmem:[#allocation4 + $0x398] sm:$0xff]
    %v2091 = vld [vmem:[#allocation4 + $0x3a0] sm:$0xff]
    %v2092 = vld [vmem:[#allocation4 + $0x3a8] sm:$0xff]
    %v2093 = vld [vmem:[#allocation4 + $0x3b0] sm:$0xff]
    %v2094 = vld [vmem:[#allocation4 + $0x3b8] sm:$0xff]
    %v2095 = vld [vmem:[#allocation4 + $0x3c0] sm:$0xff]
    %v2096 = vld [vmem:[#allocation4 + $0x3c8] sm:$0xff]
    %v2097 = vld [vmem:[#allocation4 + $0x3d0] sm:$0xff]
    %v2098 = vld [vmem:[#allocation4 + $0x3d8] sm:$0xff]
    %v2099 = vld [vmem:[#allocation4 + $0x3e0] sm:$0xff]
    %v2100 = vld [vmem:[#allocation4 + $0x3e8] sm:$0xff]
    %v2101 = vld [vmem:[#allocation4 + $0x3f0] sm:$0xff]
    %v2102 = vld [vmem:[#allocation4 + $0x3f8] sm:$0xff]
    %v2103 = vld [vmem:[#allocation6] sm:$0x3]
    %v2105 = vlaneseq
    %v2106 = vshrl.u32 %v2105, 7
    %v2107 = vsub.s32 0, %v2106
    %v2108 = vrot.slane %v2103, %v2107
    %v2109 = vlaneseq
    %v2110 = vshrl.u32 %v2109, 7
    %v2111 = vsub.s32 1, %v2110
    %v2112 = vrot.slane %v2103, %v2111
    %2115 = vmatprep.subr.mxu0 %v1976
    %2116 = vmatpush1.msra.mxu0 %v1975
    %2117 = vmatprep.subr.mxu0 %v1978
    %2118 = vmatpush1.msra.mxu0 %v1977
    %2119 = vmatprep.subr.mxu0 %v1980
    %2120 = vmatpush1.msra.mxu0 %v1979
    %2121 = vmatprep.subr.mxu0 %v1982
    %2122 = vmatpush1.msra.mxu0 %v1981
    %2123 = vmatprep.subr.mxu0 %v1984
    %2124 = vmatpush1.msra.mxu0 %v1983
    %2125 = vmatprep.subr.mxu0 %v1986
    %2126 = vmatpush1.msra.mxu0 %v1985
    %2127 = vmatprep.subr.mxu0 %v1988
    %2128 = vmatpush1.msra.mxu0 %v1987
    %2129 = vmatprep.subr.mxu0 %v1990
    %2130 = vmatpush1.msra.mxu0 %v1989
    %2131 = vmatprep.subr.mxu0 %v1992
    %2132 = vmatpush1.msra.mxu0 %v1991
    %2133 = vmatprep.subr.mxu0 %v1994
    %2134 = vmatpush1.msra.mxu0 %v1993
    %2135 = vmatprep.subr.mxu0 %v1996
    %2136 = vmatpush1.msra.mxu0 %v1995
    %2137 = vmatprep.subr.mxu0 %v1998
    %2138 = vmatpush1.msra.mxu0 %v1997
    %2139 = vmatprep.subr.mxu0 %v2000
    %2140 = vmatpush1.msra.mxu0 %v1999
    %2141 = vmatprep.subr.mxu0 %v2002
    %2142 = vmatpush1.msra.mxu0 %v2001
    %2143 = vmatprep.subr.mxu0 %v2004
    %2144 = vmatpush1.msra.mxu0 %v2003
    %2145 = vmatprep.subr.mxu0 %v2006
    %2146 = vmatpush1.msra.mxu0 %v2005
    %2147 = vmatprep.subr.mxu0 %v2008
    %2148 = vmatpush1.msra.mxu0 %v2007
    %2149 = vmatprep.subr.mxu0 %v2010
    %2150 = vmatpush1.msra.mxu0 %v2009
    %2151 = vmatprep.subr.mxu0 %v2012
    %2152 = vmatpush1.msra.mxu0 %v2011
    %2153 = vmatprep.subr.mxu0 %v2014
    %2154 = vmatpush1.msra.mxu0 %v2013
    %2155 = vmatprep.subr.mxu0 %v2016
    %2156 = vmatpush1.msra.mxu0 %v2015
    %2157 = vmatprep.subr.mxu0 %v2018
    %2158 = vmatpush1.msra.mxu0 %v2017
    %2159 = vmatprep.subr.mxu0 %v2020
    %2160 = vmatpush1.msra.mxu0 %v2019
    %2161 = vmatprep.subr.mxu0 %v2022
    %2162 = vmatpush1.msra.mxu0 %v2021
    %2163 = vmatprep.subr.mxu0 %v2024
    %2164 = vmatpush1.msra.mxu0 %v2023
    %2165 = vmatprep.subr.mxu0 %v2026
    %2166 = vmatpush1.msra.mxu0 %v2025
    %2167 = vmatprep.subr.mxu0 %v2028
    %2168 = vmatpush1.msra.mxu0 %v2027
    %2169 = vmatprep.subr.mxu0 %v2030
    %2170 = vmatpush1.msra.mxu0 %v2029
    %2171 = vmatprep.subr.mxu0 %v2032
    %2172 = vmatpush1.msra.mxu0 %v2031
    %2173 = vmatprep.subr.mxu0 %v2034
    %2174 = vmatpush1.msra.mxu0 %v2033
    %2175 = vmatprep.subr.mxu0 %v2036
    %2176 = vmatpush1.msra.mxu0 %v2035
    %2177 = vmatprep.subr.mxu0 %v2038
    %2178 = vmatpush1.msra.mxu0 %v2037
    %2179 = vmatprep.mubr.f32.mxu0 %v1972
    %2180 = vmatmul.mubr.f32.gmra.mrb[0].mxu0 %v1971
    %v2181 = vpop.f32.mrb[0].mxu0
    %v2182 = vadd.f32 %v2108, %v2181
    %v2183 = vpop.f32.mrb[0].mxu0
    %v2184 = vadd.f32 %v2112, %v2183
    %2185 = vdwg.mxu0
    %2186 = vmatprep.subr.mxu0 %v2040
    %2187 = vmatpush1.msra.mxu0 %v2039
    %2188 = vmatprep.subr.mxu0 %v2042
    %2189 = vmatpush1.msra.mxu0 %v2041
    %2190 = vmatprep.subr.mxu0 %v2044
    %2191 = vmatpush1.msra.mxu0 %v2043
    %2192 = vmatprep.subr.mxu0 %v2046
    %2193 = vmatpush1.msra.mxu0 %v2045
    %2194 = vmatprep.subr.mxu0 %v2048
    %2195 = vmatpush1.msra.mxu0 %v2047
    %2196 = vmatprep.subr.mxu0 %v2050
    %2197 = vmatpush1.msra.mxu0 %v2049
    %2198 = vmatprep.subr.mxu0 %v2052
    %2199 = vmatpush1.msra.mxu0 %v2051
    %2200 = vmatprep.subr.mxu0 %v2054
    %2201 = vmatpush1.msra.mxu0 %v2053
    %2202 = vmatprep.subr.mxu0 %v2056
    %2203 = vmatpush1.msra.mxu0 %v2055
    %2204 = vmatprep.subr.mxu0 %v2058
    %2205 = vmatpush1.msra.mxu0 %v2057
    %2206 = vmatprep.subr.mxu0 %v2060
    %2207 = vmatpush1.msra.mxu0 %v2059
    %2208 = vmatprep.subr.mxu0 %v2062
    %2209 = vmatpush1.msra.mxu0 %v2061
    %2210 = vmatprep.subr.mxu0 %v2064
    %2211 = vmatpush1.msra.mxu0 %v2063
    %2212 = vmatprep.subr.mxu0 %v2066
    %2213 = vmatpush1.msra.mxu0 %v2065
    %2214 = vmatprep.subr.mxu0 %v2068
    %2215 = vmatpush1.msra.mxu0 %v2067
    %2216 = vmatprep.subr.mxu0 %v2070
    %2217 = vmatpush1.msra.mxu0 %v2069
    %2218 = vmatprep.subr.mxu0 %v2072
    %2219 = vmatpush1.msra.mxu0 %v2071
    %2220 = vmatprep.subr.mxu0 %v2074
    %2221 = vmatpush1.msra.mxu0 %v2073
    %2222 = vmatprep.subr.mxu0 %v2076
    %2223 = vmatpush1.msra.mxu0 %v2075
    %2224 = vmatprep.subr.mxu0 %v2078
    %2225 = vmatpush1.msra.mxu0 %v2077
    %2226 = vmatprep.subr.mxu0 %v2080
    %2227 = vmatpush1.msra.mxu0 %v2079
    %2228 = vmatprep.subr.mxu0 %v2082
    %2229 = vmatpush1.msra.mxu0 %v2081
    %2230 = vmatprep.subr.mxu0 %v2084
    %2231 = vmatpush1.msra.mxu0 %v2083
    %2232 = vmatprep.subr.mxu0 %v2086
    %2233 = vmatpush1.msra.mxu0 %v2085
    %2234 = vmatprep.subr.mxu0 %v2088
    %2235 = vmatpush1.msra.mxu0 %v2087
    %2236 = vmatprep.subr.mxu0 %v2090
    %2237 = vmatpush1.msra.mxu0 %v2089
    %2238 = vmatprep.subr.mxu0 %v2092
    %2239 = vmatpush1.msra.mxu0 %v2091
    %2240 = vmatprep.subr.mxu0 %v2094
    %2241 = vmatpush1.msra.mxu0 %v2093
    %2242 = vmatprep.subr.mxu0 %v2096
    %2243 = vmatpush1.msra.mxu0 %v2095
    %2244 = vmatprep.subr.mxu0 %v2098
    %2245 = vmatpush1.msra.mxu0 %v2097
    %2246 = vmatprep.subr.mxu0 %v2100
    %2247 = vmatpush1.msra.mxu0 %v2099
    %2248 = vmatprep.subr.mxu0 %v2102
    %2249 = vmatpush1.msra.mxu0 %v2101
    %2250 = vmatprep.mubr.f32.mxu0 %v1974
    %2251 = vmatmul.mubr.f32.gmra.mrb[0].mxu0 %v1973
    %v2252 = vpop.f32.mrb[0].mxu0
    %v2253 = vadd.f32 %v2182, %v2252
    %v2254 = vpop.f32.mrb[0].mxu0
    %v2255 = vadd.f32 %v2184, %v2254
    %2256 = vdwg.mxu0
    %vm2257 = vcmp.gt.f32.partialorder %v2253, 0.0
    %vm2258 = vcmp.gt.f32.partialorder %v2255, 0.0
    %v2259 = vmul.f32 %v2253, 0.2
    %v2260 = vmul.f32 %v2255, 0.2
    %v2261 = vsel %vm2257, %v2253, %v2259
    %v2262 = vsel %vm2258, %v2255, %v2260
    %v2263 = vld [vmem:[%s4] sm:$0xff]
    %v2264 = vld [vmem:[%s4 + $0x8] sm:$0xff]
    %v2265 = vld [vmem:[%s4 + $0x10] sm:$0xff]
    %v2266 = vld [vmem:[%s4 + $0x18] sm:$0xff]
    %v2267 = vld [vmem:[%s4 + $0x20] sm:$0xff]
    %v2268 = vld [vmem:[%s4 + $0x28] sm:$0xff]
    %v2269 = vld [vmem:[%s4 + $0x30] sm:$0xff]
    %v2270 = vld [vmem:[%s4 + $0x38] sm:$0xff]
    %v2271 = vld [vmem:[%s4 + $0x40] sm:$0xff]
    %v2272 = vld [vmem:[%s4 + $0x48] sm:$0xff]
    %v2273 = vld [vmem:[%s4 + $0x50] sm:$0xff]
    %v2274 = vld [vmem:[%s4 + $0x58] sm:$0xff]
    %v2275 = vld [vmem:[%s4 + $0x60] sm:$0xff]
    %v2276 = vld [vmem:[%s4 + $0x68] sm:$0xff]
    %v2277 = vld [vmem:[%s4 + $0x70] sm:$0xff]
    %v2278 = vld [vmem:[%s4 + $0x78] sm:$0xff]
    %v2279 = vld [vmem:[%s4 + $0x80] sm:$0xff]
    %v2280 = vld [vmem:[%s4 + $0x88] sm:$0xff]
    %v2281 = vld [vmem:[%s4 + $0x90] sm:$0xff]
    %v2282 = vld [vmem:[%s4 + $0x98] sm:$0xff]
    %v2283 = vld [vmem:[%s4 + $0xa0] sm:$0xff]
    %v2284 = vld [vmem:[%s4 + $0xa8] sm:$0xff]
    %v2285 = vld [vmem:[%s4 + $0xb0] sm:$0xff]
    %v2286 = vld [vmem:[%s4 + $0xb8] sm:$0xff]
    %v2287 = vld [vmem:[%s4 + $0xc0] sm:$0xff]
    %v2288 = vld [vmem:[%s4 + $0xc8] sm:$0xff]
    %v2289 = vld [vmem:[%s4 + $0xd0] sm:$0xff]
    %v2290 = vld [vmem:[%s4 + $0xd8] sm:$0xff]
    %v2291 = vld [vmem:[%s4 + $0xe0] sm:$0xff]
    %v2292 = vld [vmem:[%s4 + $0xe8] sm:$0xff]
    %v2293 = vld [vmem:[%s4 + $0xf0] sm:$0xff]
    %v2294 = vld [vmem:[%s4 + $0xf8] sm:$0xff]
    %2295 = vmatprep.subr.mxu0 0.0
    %2296 = vmatpush1.msra.mxu0 %v2263
    %2297 = vmatprep.subr.mxu0 0.0
    %2298 = vmatpush1.msra.mxu0 %v2264
    %2299 = vmatprep.subr.mxu0 0.0
    %2300 = vmatpush1.msra.mxu0 %v2265
    %2301 = vmatprep.subr.mxu0 0.0
    %2302 = vmatpush1.msra.mxu0 %v2266
    %2303 = vmatprep.subr.mxu0 0.0
    %2304 = vmatpush1.msra.mxu0 %v2267
    %2305 = vmatprep.subr.mxu0 0.0
    %2306 = vmatpush1.msra.mxu0 %v2268
    %2307 = vmatprep.subr.mxu0 0.0
    %2308 = vmatpush1.msra.mxu0 %v2269
    %2309 = vmatprep.subr.mxu0 0.0
    %2310 = vmatpush1.msra.mxu0 %v2270
    %2311 = vmatprep.subr.mxu0 0.0
    %2312 = vmatpush1.msra.mxu0 %v2271
    %2313 = vmatprep.subr.mxu0 0.0
    %2314 = vmatpush1.msra.mxu0 %v2272
    %2315 = vmatprep.subr.mxu0 0.0
    %2316 = vmatpush1.msra.mxu0 %v2273
    %2317 = vmatprep.subr.mxu0 0.0
    %2318 = vmatpush1.msra.mxu0 %v2274
    %2319 = vmatprep.subr.mxu0 0.0
    %2320 = vmatpush1.msra.mxu0 %v2275
    %2321 = vmatprep.subr.mxu0 0.0
    %2322 = vmatpush1.msra.mxu0 %v2276
    %2323 = vmatprep.subr.mxu0 0.0
    %2324 = vmatpush1.msra.mxu0 %v2277
    %2325 = vmatprep.subr.mxu0 0.0
    %2326 = vmatpush1.msra.mxu0 %v2278
    %2327 = vmatprep.subr.mxu0 0.0
    %2328 = vmatpush1.msra.mxu0 %v2279
    %2329 = vmatprep.subr.mxu0 0.0
    %2330 = vmatpush1.msra.mxu0 %v2280
    %2331 = vmatprep.subr.mxu0 0.0
    %2332 = vmatpush1.msra.mxu0 %v2281
    %2333 = vmatprep.subr.mxu0 0.0
    %2334 = vmatpush1.msra.mxu0 %v2282
    %2335 = vmatprep.subr.mxu0 0.0
    %2336 = vmatpush1.msra.mxu0 %v2283
    %2337 = vmatprep.subr.mxu0 0.0
    %2338 = vmatpush1.msra.mxu0 %v2284
    %2339 = vmatprep.subr.mxu0 0.0
    %2340 = vmatpush1.msra.mxu0 %v2285
    %2341 = vmatprep.subr.mxu0 0.0
    %2342 = vmatpush1.msra.mxu0 %v2286
    %2343 = vmatprep.subr.mxu0 0.0
    %2344 = vmatpush1.msra.mxu0 %v2287
    %2345 = vmatprep.subr.mxu0 0.0
    %2346 = vmatpush1.msra.mxu0 %v2288
    %2347 = vmatprep.subr.mxu0 0.0
    %2348 = vmatpush1.msra.mxu0 %v2289
    %2349 = vmatprep.subr.mxu0 0.0
    %2350 = vmatpush1.msra.mxu0 %v2290
    %2351 = vmatprep.subr.mxu0 0.0
    %2352 = vmatpush1.msra.mxu0 %v2291
    %2353 = vmatprep.subr.mxu0 0.0
    %2354 = vmatpush1.msra.mxu0 %v2292
    %2355 = vmatprep.subr.mxu0 0.0
    %2356 = vmatpush1.msra.mxu0 %v2293
    %2357 = vmatprep.subr.mxu0 0.0
    %2358 = vmatpush1.msra.mxu0 %v2294
    %2359 = vmatprep.mubr.f32.mxu0 %v2262
    %2360 = vmatmul.mubr.f32.gmra.mrb[0].mxu0 %v2261
    %v2361 = vpop.f32.mrb[0].mxu0
    %v2362 = vadd.f32 0.0, %v2361
    %v2363 = vpop.f32.mrb[0].mxu0
    %2364 = vdwg.mxu0
    %v2365 = vand.u32 2147483647, %v2362
    %v2366 = vsub.f32 0.0, %v2365
    %v2367 = vmul.f32 %v2366, 1.442695
    %v2368 = vpow.pop %v2367
    %v2369 = vadd.f32 %v2368, 1.0
    %v2370 = vrcp.pop %v2369
    %vm2371 = vcmp.ge.f32.partialorder %v2362, 0.0
    %v2372 = vmul.f32 %v2368, %v2370
    %v2373 = vsel %vm2371, %v2370, %v2372
    %vm2374 = vcmask 7168
    %2375 = vst.msk [vmem:[%s5] sm:$0xff] %vm2374, %v2373
    // Predicated region
    $region34: #{discriminator_forward_conditional.1} parent=1 // pred_check
      _
    $region35: #{discriminator_forward_conditional.1} parent=1 // pred_check_branch
      %2377 = sbr.rel (0) target = $region37
    $region36: #{discriminator_forward_conditional.1} parent=1 // pred_region
      _
    $region37: #{discriminator_forward_conditional.1} parent=1 // pred_fallthru
      _
    // Predicated region
    $region38: #{discriminator_forward_conditional.1} parent=1 // pred_check
      _
    $region39: #{discriminator_forward_conditional.1} parent=1 // pred_check_branch
      %2379 = sbr.rel (0) target = $region41
    $region40: #{discriminator_forward_conditional.1} parent=1 // pred_region
      _
    $region41: #{discriminator_forward_conditional.1} parent=1 // pred_fallthru
      _
    %2380 = vsyncpa [#allocation3], 1
    %2381 = vsyncpa [#allocation5], 1

</llo_original>
